<compile_context>
chip_gen: v7x
topology: tpu7x:2x2x1
jax: 0.10.0
libtpu: 0.0.40
codegen_flags: <defaults>
</compile_context>

<pallas_src>
import functools

import jax
import jax.numpy as jnp
from jax.experimental import pallas as pl
from jax.experimental.pallas import tpu as pltpu

_LANES = 128
_BN_EPS = 1e-5


def _pad_to(n, m):
    return ((n + m - 1) // m) * m


def _pick_row_tile(ho, wo):
    """Output-row tile TH: keep M = TH*Wo in ~[128, 512], prefer >=2 tiles/image."""
    for need_two in (True, False):
        for t in (64, 32, 16, 8, 4, 2, 1):
            if ho % t:
                continue
            if (t * wo) % 8:            # keep the y-block second-minor dim 8-aligned
                continue
            if t * wo > 512:
                continue
            if need_two and ho // t < 2:
                continue
            return t
    return ho                           # single tile: block equals full array dims


# --------------------------------------------------------------------------- #
# Stage kernel: affine(prev BN) + ReLU -> depthwise kxk -> pointwise 1x1
# --------------------------------------------------------------------------- #
def _sepconv_stage_kernel(x_ref, scale_ref, shift_ref, w_ref,
                          y_ref, sum_ref, sq_ref, *,
                          kh, kw, dil, th, wo, pad, h, w):
    """One (image, output-row-tile) grid step.

    x_ref    : (1, Hp, Wp, Cin_pad)        bf16, spatially zero-padded image
                                           (revisited / resident across row tiles)
    scale_ref: (1, Cin_pad)                bf16, prologue per-channel affine
    shift_ref: (1, Cin_pad)                bf16
    w_ref    : (kh*kw*Cin_pad, Cout_pad)   bf16, tap-packed fused dw*pw weights
    y_ref    : (1, th*wo, Cout_pad)        bf16, pre-BN conv output tile
    sum_ref  : (1, 1, 1, Cout_pad)         f32, per-(image,row-tile) channel sum
    sq_ref   : (1, 1, 1, Cout_pad)         f32, per-(image,row-tile) channel sumsq
    """
    halo = dil * (kh - 1)
    rt = pl.program_id(1)
    r0 = pl.multiple_of(rt * th, th)

    # Rows of the padded input needed for this output-row tile (static size).
    xs = x_ref[0, pl.ds(r0, th + halo), :, :]             # (th+halo, Wp, Cin_pad) bf16

    # Prologue: previous-stage BN affine + ReLU in bf16 (VPU-native on v6e/v7x,
    # no full-image f32 temporaries).  The in-kernel border mask keeps the conv's
    # zero padding exact (otherwise the border would become relu(shift) != 0).
    scale = scale_ref[...].reshape(1, 1, -1)
    shift = shift_ref[...].reshape(1, 1, -1)
    act = jnp.maximum(xs * scale + shift, jnp.zeros_like(xs))
    row = jax.lax.broadcasted_iota(jnp.int32, act.shape, 0) + r0
    col = jax.lax.broadcasted_iota(jnp.int32, act.shape, 1)
    valid = (row >= pad) & (row < pad + h) & (col >= pad) & (col < pad + w)
    act = jnp.where(valid, act, jnp.zeros_like(act))

    # Tap-packed im2col in VMEM: one (th*wo, kh*kw*Cin_pad) patch and a single
    # MXU matmul instead of kh*kw small K=128 matmuls.
    cols = []
    for i in range(kh):                                    # static unroll
        for j in range(kw):
            win = act[i * dil:i * dil + th, j * dil:j * dil + wo, :]
            cols.append(win.reshape(th * wo, -1))
    patch = jnp.concatenate(cols, axis=-1)                 # (th*wo, kh*kw*Cin_pad)
    acc = jnp.dot(patch, w_ref[...], preferred_element_type=jnp.float32)

    y_ref[0] = acc.astype(y_ref.dtype)
    sum_ref[0, 0] = jnp.sum(acc, axis=0, keepdims=True)
    sq_ref[0, 0] = jnp.sum(acc * acc, axis=0, keepdims=True)


def _sepconv_stage(x_nhwc, scale, shift, w_flat, *, kh, kw, dil, pad):
    """x_nhwc: (N, H, W, Cin_pad) bf16 (not spatially padded).

    Returns y (N, Ho*Wo, Cout_pad) bf16 (pre-BN), per-(image,row-tile) channel
    sum / sumsq partials, and (Ho, Wo).
    """
    n, h, w, cin_pad = x_nhwc.shape
    cout_pad = w_flat.shape[-1]
    ho = h + 2 * pad - dil * (kh - 1)
    wo = w + 2 * pad - dil * (kw - 1)
    hp, wp = h + 2 * pad, w + 2 * pad

    th = _pick_row_tile(ho, wo)
    n_rt = ho // th

    xp = jnp.pad(x_nhwc, ((0, 0), (pad, pad), (pad, pad), (0, 0)))

    kernel = functools.partial(_sepconv_stage_kernel, kh=kh, kw=kw, dil=dil,
                               th=th, wo=wo, pad=pad, h=h, w=w)
    flops = 2 * n * ho * wo * (kh * kw * cin_pad) * cout_pad
    bytes_accessed = (xp.size * 2 + w_flat.size * 2           # weights fetched once
                      + n * ho * wo * cout_pad * 2 + 2 * n * n_rt * cout_pad * 4)

    y, s, sq = pl.pallas_call(
        kernel,
        grid=(n, n_rt),
        in_specs=[
            # Whole padded image, revisited (kept resident) across row tiles.
            pl.BlockSpec((1, hp, wp, cin_pad), lambda b, t: (b, 0, 0, 0)),
            pl.BlockSpec((1, cin_pad), lambda b, t: (0, 0)),
            pl.BlockSpec((1, cin_pad), lambda b, t: (0, 0)),
            pl.BlockSpec((kh * kw * cin_pad, cout_pad), lambda b, t: (0, 0)),
        ],
        out_specs=[
            pl.BlockSpec((1, th * wo, cout_pad), lambda b, t: (b, t, 0)),
            pl.BlockSpec((1, 1, 1, cout_pad), lambda b, t: (b, t, 0, 0)),
            pl.BlockSpec((1, 1, 1, cout_pad), lambda b, t: (b, t, 0, 0)),
        ],
        out_shape=[
            jax.ShapeDtypeStruct((n, ho * wo, cout_pad), jnp.bfloat16),
            jax.ShapeDtypeStruct((n, n_rt, 1, cout_pad), jnp.float32),
            jax.ShapeDtypeStruct((n, n_rt, 1, cout_pad), jnp.float32),
        ],
        compiler_params=pltpu.CompilerParams(
            dimension_semantics=("parallel", "parallel")),
        cost_estimate=pl.CostEstimate(flops=flops, transcendentals=0,
                                      bytes_accessed=bytes_accessed),
    )(xp, scale, shift, w_flat)
    return y, s, sq, ho, wo


# --------------------------------------------------------------------------- #
# Final BatchNorm apply (no ReLU), fused with NHWC -> NCHW layout change
# --------------------------------------------------------------------------- #
def _bn_nchw_kernel(y_ref, scale_ref, shift_ref, o_ref):
    y = y_ref[0].astype(jnp.float32)                       # (tm, Cpad)
    z = y * scale_ref[...] + shift_ref[...]
    o_ref[0] = z.T                                         # (Cpad, tm), lane-dense


def _apply_bn_nchw(y, scale, shift):
    """y: (N, HW, Cpad) bf16 -> (N, Cpad, HW) f32 with the BN affine applied."""
    n, hw, cpad = y.shape
    tm = hw
    for cand in (1024, 512, 256, 128):
        if hw % cand == 0:
            tm = cand
            break
    return pl.pallas_call(
        _bn_nchw_kernel,
        grid=(n, hw // tm),
        in_specs=[pl.BlockSpec((1, tm, cpad), lambda b, t: (b, t, 0)),
                  pl.BlockSpec((1, cpad), lambda b, t: (0, 0)),
                  pl.BlockSpec((1, cpad), lambda b, t: (0, 0))],
        out_specs=pl.BlockSpec((1, cpad, tm), lambda b, t: (b, 0, t)),
        out_shape=jax.ShapeDtypeStruct((n, cpad, hw), jnp.float32),
        compiler_params=pltpu.CompilerParams(
            dimension_semantics=("parallel", "parallel")),
        cost_estimate=pl.CostEstimate(flops=2 * n * hw * cpad, transcendentals=0,
                                      bytes_accessed=n * hw * cpad * 6),
    )(y, scale, shift)


# --------------------------------------------------------------------------- #
# Host-side helpers (tiny per-channel math / weight folding / layout plumbing)
# --------------------------------------------------------------------------- #
def _fused_tap_weights(dw, pw, cin_pad, cout_pad):
    """Tap-packed fused weight: W[t*Cin_pad + c, :] = dw[c,0,i,j] * pw[:,c,0,0]."""
    c_in = dw.shape[0]
    c_out = pw.shape[0]
    kh, kw = dw.shape[2], dw.shape[3]
    dwf = dw[:, 0, :, :].reshape(c_in, kh * kw).T          # (kh*kw, C_in)
    pwf = pw[:, :, 0, 0].T                                 # (C_in, C_out)
    weff = dwf[:, :, None] * pwf[None, :, :]               # (kh*kw, C_in, C_out)
    out = jnp.zeros((kh * kw, cin_pad, cout_pad), jnp.float32)
    out = out.at[:, :c_in, :c_out].set(weff)
    return out.reshape(kh * kw * cin_pad, cout_pad).astype(jnp.bfloat16)


def _bn_fold(sums, sqs, count, gamma_pad, beta_pad, eps):
    """Per-channel scale/shift from partial sums (PyTorch train-mode biased var)."""
    c = sums.shape[-1]
    s = jnp.sum(sums.reshape(-1, c), axis=0).reshape(1, -1)
    sq = jnp.sum(sqs.reshape(-1, c), axis=0).reshape(1, -1)
    mean = s / count
    var = jnp.maximum(sq / count - mean * mean, 0.0)
    scale = gamma_pad * jax.lax.rsqrt(var + eps)
    shift = beta_pad - mean * scale
    return scale, shift


def sharp_sep_conv(x, dw1, pw1, gamma1, beta1, dw2, pw2, gamma2, beta2, *,
                   kernel_size=3, stride=1, padding=1, dilation=1, eps=_BN_EPS):
    """SharpSepConv forward. x: (N, C_in, H, W) NCHW; returns (N, C_out, Ho, Wo)."""
    if stride != 1:
        # TODO(synk): strided depthwise taps not implemented in the Pallas kernel.
        raise NotImplementedError("stride > 1 is not supported")

    n, c_in, h, w = x.shape
    c_mid = pw1.shape[0]
    c_out = pw2.shape[0]
    k = kernel_size

    cin_pad = _pad_to(c_in, _LANES)
    cmid_pad = _pad_to(c_mid, _LANES)
    cout_pad = _pad_to(c_out, _LANES)

    # NCHW -> NHWC, channel zero-pad to 128 lanes, bf16 for the MXU.
    x_nhwc = jnp.transpose(x, (0, 2, 3, 1)).astype(jnp.bfloat16)
    x_nhwc = jnp.pad(x_nhwc, ((0, 0), (0, 0), (0, 0), (0, cin_pad - c_in)))

    w1 = _fused_tap_weights(dw1, pw1, cin_pad, cmid_pad)
    w2 = _fused_tap_weights(dw2, pw2, cmid_pad, cout_pad)

    g1 = jnp.zeros((1, cmid_pad), jnp.float32).at[0, :c_mid].set(gamma1)
    b1 = jnp.zeros((1, cmid_pad), jnp.float32).at[0, :c_mid].set(beta1)
    g2 = jnp.zeros((1, cout_pad), jnp.float32).at[0, :c_out].set(gamma2)
    b2 = jnp.zeros((1, cout_pad), jnp.float32).at[0, :c_out].set(beta2)

    # Stage 1: ReLU -> depthwise kxk -> pointwise 1x1 (identity prologue affine).
    id_scale = jnp.ones((1, cin_pad), jnp.bfloat16)
    id_shift = jnp.zeros((1, cin_pad), jnp.bfloat16)
    y1, s1, sq1, ho, wo = _sepconv_stage(x_nhwc, id_scale, id_shift, w1,
                                         kh=k, kw=k, dil=dilation, pad=padding)
    scale1, shift1 = _bn_fold(s1, sq1, n * ho * wo, g1, b1, eps)

    # Stage 2: BN1 + ReLU fused into the prologue; depthwise kxk (pad (k-1)//2)
    # -> pointwise 1x1.  (Stats are from the f32 accumulator; normalization is
    # applied to the bf16-rounded y1 — tiny systematic mismatch, within tolerance.)
    y1_img = y1.reshape(n, ho, wo, cmid_pad)
    y2, s2, sq2, ho2, wo2 = _sepconv_stage(
        y1_img, scale1.astype(jnp.bfloat16), shift1.astype(jnp.bfloat16), w2,
        kh=k, kw=k, dil=1, pad=(k - 1) // 2)
    scale2, shift2 = _bn_fold(s2, sq2, n * ho2 * wo2, g2, b2, eps)

    # Final BatchNorm (no ReLU) fused with the NHWC -> NCHW layout change; only a
    # cheap channel slice + free reshape remain outside the kernel.
    out_nc = _apply_bn_nchw(y2, scale2, shift2)            # (N, Cout_pad, Ho2*Wo2)
    return out_nc[:, :c_out, :].reshape(n, c_out, ho2, wo2)


# --------------------------------------------------------------------------- #
# Pure-JAX f32 reference (loose sanity check against the bf16 kernel path)
# --------------------------------------------------------------------------- #
def _reference(x, dw1, pw1, g1, b1, dw2, pw2, g2, b2, *, k, stride, padding,
               dilation, eps):
    def conv(h, wgt, s, p, d, groups):
        return jax.lax.conv_general_dilated(
            h, wgt, window_strides=(s, s), padding=((p, p), (p, p)),
            rhs_dilation=(d, d), dimension_numbers=("NCHW", "OIHW", "NCHW"),
            feature_group_count=groups)

    def bn(h, g, b):
        mean = jnp.mean(h, axis=(0, 2, 3), keepdims=True)
        var = jnp.mean((h - mean) ** 2, axis=(0, 2, 3), keepdims=True)
        return ((h - mean) * jax.lax.rsqrt(var + eps) * g.reshape(1, -1, 1, 1)
                + b.reshape(1, -1, 1, 1))

    h = jnp.maximum(x, 0.0)
    h = conv(h, dw1, stride, padding, dilation, dw1.shape[0])
    h = conv(h, pw1, 1, 0, 1, 1)
    h = jnp.maximum(bn(h, g1, b1), 0.0)
    h = conv(h, dw2, 1, (k - 1) // 2, 1, dw2.shape[0])
    h = conv(h, pw2, 1, 0, 1, 1)
    return bn(h, g2, b2)


if __name__ == "__main__":
    # SharpSepConv(C_in=4, C_out=8, kernel_size=3, stride=1, padding=1) -> c_mid=8
    C_in, C_out, ksize, stride, padding, dilation = 4, 8, 3, 1, 1, 1
    c_mid = C_out
    N, H, W = 2, 16, 16

    key = jax.random.PRNGKey(0)
    kx, k1, k2, k3, k4 = jax.random.split(key, 5)
    x = jax.random.normal(kx, (N, C_in, H, W), dtype=jnp.float32)
    dw1 = jax.random.normal(k1, (C_in, 1, ksize, ksize), jnp.float32) * (2.0 / (ksize * ksize)) ** 0.5
    pw1 = jax.random.normal(k2, (c_mid, C_in, 1, 1), jnp.float32) * (2.0 / C_in) ** 0.5
    dw2 = jax.random.normal(k3, (c_mid, 1, ksize, ksize), jnp.float32) * (2.0 / (ksize * ksize)) ** 0.5
    pw2 = jax.random.normal(k4, (C_out, c_mid, 1, 1), jnp.float32) * (2.0 / c_mid) ** 0.5
    gamma1 = jnp.ones((c_mid,), jnp.float32)
    beta1 = jnp.zeros((c_mid,), jnp.float32)
    gamma2 = jnp.ones((C_out,), jnp.float32)
    beta2 = jnp.zeros((C_out,), jnp.float32)

    fwd = jax.jit(functools.partial(sharp_sep_conv, kernel_size=ksize,
                                    stride=stride, padding=padding,
                                    dilation=dilation))
    out = fwd(x, dw1, pw1, gamma1, beta1, dw2, pw2, gamma2, beta2)
    out = jax.block_until_ready(out)
    assert out.shape == (N, C_out, H, W), out.shape

    ref = _reference(x, dw1, pw1, gamma1, beta1, dw2, pw2, gamma2, beta2,
                     k=ksize, stride=stride, padding=padding,
                     dilation=dilation, eps=_BN_EPS)
    max_err = float(jnp.max(jnp.abs(out - ref)))
    assert max_err < 0.25, f"max abs error vs f32 reference: {max_err}"
    print("KERNEL_OK")
</pallas_src>

<mosaic_0001>
module attributes {stable_mosaic.version = 11 : i64} {
  func.func @_sepconv_stage_kernel(%arg0: i32, %arg1: i32, %arg2: memref<1x18x18x128xbf16, #tpu.memory_space<vmem>>, %arg3: memref<1x128xbf16, #tpu.memory_space<vmem>>, %arg4: memref<1x128xbf16, #tpu.memory_space<vmem>>, %arg5: memref<1152x128xbf16, #tpu.memory_space<vmem>>, %arg6: memref<1x128x128xbf16, #tpu.memory_space<vmem>>, %arg7: memref<1x1x1x128xf32, #tpu.memory_space<vmem>>, %arg8: memref<1x1x1x128xf32, #tpu.memory_space<vmem>>) attributes {dimension_semantics = [#tpu.dimension_semantics<parallel>, #tpu.dimension_semantics<parallel>], iteration_bounds = array<i64: 2, 2>, scalar_prefetch = 0 : i64, scratch_operands = 0 : i64, tpu.core_type = #tpu.core_type<tc>, window_params = [{transform_indices = @transform_0, window_bounds = array<i64: 1, 18, 18, 128>}, {pipeline_mode = #tpu.pipeline_mode<synchronous>, transform_indices = @transform_1, window_bounds = array<i64: 1, 128>}, {pipeline_mode = #tpu.pipeline_mode<synchronous>, transform_indices = @transform_2, window_bounds = array<i64: 1, 128>}, {pipeline_mode = #tpu.pipeline_mode<synchronous>, transform_indices = @transform_3, window_bounds = array<i64: 1152, 128>}, {transform_indices = @transform_4, window_bounds = array<i64: 1, 128, 128>}, {transform_indices = @transform_5, window_bounds = array<i64: 1, 1, 1, 128>}, {transform_indices = @transform_6, window_bounds = array<i64: 1, 1, 1, 128>}]} {
    %c8_i32 = arith.constant 8 : i32
    %0 = arith.muli %arg1, %c8_i32 : i32
    %1 = tpu.assume_multiple %0, 8 : i32
    %c0 = arith.constant 0 : index
    %2 = arith.index_cast %1 : i32 to index
    %c0_0 = arith.constant 0 : index
    %c0_1 = arith.constant 0 : index
    %3 = vector.load %arg2[%c0, %2, %c0_0, %c0_1] : memref<1x18x18x128xbf16, #tpu.memory_space<vmem>>, vector<1x10x18x128xbf16>
    %4 = vector.shape_cast %3 : vector<1x10x18x128xbf16> to vector<10x18x128xbf16>
    %c0_2 = arith.constant 0 : index
    %c0_3 = arith.constant 0 : index
    %5 = vector.load %arg3[%c0_2, %c0_3] : memref<1x128xbf16, #tpu.memory_space<vmem>>, vector<1x128xbf16>
    %6 = vector.shape_cast %5 : vector<1x128xbf16> to vector<1x1x128xbf16>
    %c0_4 = arith.constant 0 : index
    %c0_5 = arith.constant 0 : index
    %7 = vector.load %arg4[%c0_4, %c0_5] : memref<1x128xbf16, #tpu.memory_space<vmem>>, vector<1x128xbf16>
    %8 = vector.shape_cast %7 : vector<1x128xbf16> to vector<1x1x128xbf16>
    %9 = vector.broadcast %6 : vector<1x1x128xbf16> to vector<10x18x128xbf16>
    %10 = arith.mulf %4, %9 : vector<10x18x128xbf16>
    %11 = vector.broadcast %8 : vector<1x1x128xbf16> to vector<10x18x128xbf16>
    %12 = arith.addf %10, %11 : vector<10x18x128xbf16>
    %cst = arith.constant 0.000000e+00 : bf16
    %13 = vector.broadcast %cst : bf16 to vector<10x18x128xbf16>
    %14 = arith.maximumf %12, %13 : vector<10x18x128xbf16>
    %15 = tpu.iota {dimensions = array<i32: 0>} : vector<10x18x128xi32>
    %16 = vector.broadcast %1 : i32 to vector<10x18x128xi32>
    %17 = arith.addi %15, %16 : vector<10x18x128xi32>
    %18 = tpu.iota {dimensions = array<i32: 1>} : vector<10x18x128xi32>
    %c1_i32 = arith.constant 1 : i32
    %19 = vector.broadcast %c1_i32 : i32 to vector<10x18x128xi32>
    %20 = arith.cmpi sge, %17, %19 : vector<10x18x128xi32>
    %c17_i32 = arith.constant 17 : i32
    %21 = vector.broadcast %c17_i32 : i32 to vector<10x18x128xi32>
    %22 = arith.cmpi slt, %17, %21 : vector<10x18x128xi32>
    %23 = arith.andi %20, %22 : vector<10x18x128xi1>
    %c1_i32_6 = arith.constant 1 : i32
    %24 = vector.broadcast %c1_i32_6 : i32 to vector<10x18x128xi32>
    %25 = arith.cmpi sge, %18, %24 : vector<10x18x128xi32>
    %26 = arith.andi %23, %25 : vector<10x18x128xi1>
    %c17_i32_7 = arith.constant 17 : i32
    %27 = vector.broadcast %c17_i32_7 : i32 to vector<10x18x128xi32>
    %28 = arith.cmpi slt, %18, %27 : vector<10x18x128xi32>
    %29 = arith.andi %26, %28 : vector<10x18x128xi1>
    %cst_8 = arith.constant 0.000000e+00 : bf16
    %30 = vector.broadcast %cst_8 : bf16 to vector<10x18x128xbf16>
    %31 = arith.select %29, %14, %30 : vector<10x18x128xi1>, vector<10x18x128xbf16>
    %32 = vector.extract_strided_slice %31 {offsets = [0, 0, 0], sizes = [8, 16, 128], strides = [1, 1, 1]} : vector<10x18x128xbf16> to vector<8x16x128xbf16>
    %33 = vector.shape_cast %32 : vector<8x16x128xbf16> to vector<128x128xbf16>
    %34 = vector.extract_strided_slice %31 {offsets = [0, 1, 0], sizes = [8, 16, 128], strides = [1, 1, 1]} : vector<10x18x128xbf16> to vector<8x16x128xbf16>
    %35 = vector.shape_cast %34 : vector<8x16x128xbf16> to vector<128x128xbf16>
    %36 = vector.extract_strided_slice %31 {offsets = [0, 2, 0], sizes = [8, 16, 128], strides = [1, 1, 1]} : vector<10x18x128xbf16> to vector<8x16x128xbf16>
    %37 = vector.shape_cast %36 : vector<8x16x128xbf16> to vector<128x128xbf16>
    %38 = vector.extract_strided_slice %31 {offsets = [1, 0, 0], sizes = [8, 16, 128], strides = [1, 1, 1]} : vector<10x18x128xbf16> to vector<8x16x128xbf16>
    %39 = vector.shape_cast %38 : vector<8x16x128xbf16> to vector<128x128xbf16>
    %40 = vector.extract_strided_slice %31 {offsets = [1, 1, 0], sizes = [8, 16, 128], strides = [1, 1, 1]} : vector<10x18x128xbf16> to vector<8x16x128xbf16>
    %41 = vector.shape_cast %40 : vector<8x16x128xbf16> to vector<128x128xbf16>
    %42 = vector.extract_strided_slice %31 {offsets = [1, 2, 0], sizes = [8, 16, 128], strides = [1, 1, 1]} : vector<10x18x128xbf16> to vector<8x16x128xbf16>
    %43 = vector.shape_cast %42 : vector<8x16x128xbf16> to vector<128x128xbf16>
    %44 = vector.extract_strided_slice %31 {offsets = [2, 0, 0], sizes = [8, 16, 128], strides = [1, 1, 1]} : vector<10x18x128xbf16> to vector<8x16x128xbf16>
    %45 = vector.shape_cast %44 : vector<8x16x128xbf16> to vector<128x128xbf16>
    %46 = vector.extract_strided_slice %31 {offsets = [2, 1, 0], sizes = [8, 16, 128], strides = [1, 1, 1]} : vector<10x18x128xbf16> to vector<8x16x128xbf16>
    %47 = vector.shape_cast %46 : vector<8x16x128xbf16> to vector<128x128xbf16>
    %48 = vector.extract_strided_slice %31 {offsets = [2, 2, 0], sizes = [8, 16, 128], strides = [1, 1, 1]} : vector<10x18x128xbf16> to vector<8x16x128xbf16>
    %49 = vector.shape_cast %48 : vector<8x16x128xbf16> to vector<128x128xbf16>
    %50 = tpu.concatenate %33, %35, %37, %39, %41, %43, %45, %47, %49 in 1 : vector<128x128xbf16>, vector<128x128xbf16>, vector<128x128xbf16>, vector<128x128xbf16>, vector<128x128xbf16>, vector<128x128xbf16>, vector<128x128xbf16>, vector<128x128xbf16>, vector<128x128xbf16> -> vector<128x1152xbf16>
    %c0_9 = arith.constant 0 : index
    %c0_10 = arith.constant 0 : index
    %51 = vector.load %arg5[%c0_9, %c0_10] : memref<1152x128xbf16, #tpu.memory_space<vmem>>, vector<1152x128xbf16>
    %cst_11 = arith.constant dense<0.000000e+00> : vector<128x128xf32>
    %52 = tpu.matmul %50, %51, %cst_11 {dimension_numbers = #tpu.dot_dimension_numbers<[1], [0], [0], [1], [0, 0, 1, 1], [], []>} : vector<128x1152xbf16>, vector<1152x128xbf16>, vector<128x128xf32> -> vector<128x128xf32>
    %53 = arith.truncf %52 : vector<128x128xf32> to vector<128x128xbf16>
    %c0_12 = arith.constant 0 : index
    %c0_13 = arith.constant 0 : index
    %c0_14 = arith.constant 0 : index
    %54 = vector.load %arg6[%c0_12, %c0_13, %c0_14] : memref<1x128x128xbf16, #tpu.memory_space<vmem>>, vector<1x128x128xbf16>
    %55 = vector.shape_cast %54 : vector<1x128x128xbf16> to vector<128x128xbf16>
    %56 = vector.shape_cast %53 : vector<128x128xbf16> to vector<1x128x128xbf16>
    tpu.vector_store %arg6[%c0_12, %c0_13, %c0_14], %56 {strides = array<i32>} : memref<1x128x128xbf16, #tpu.memory_space<vmem>>, vector<1x128x128xbf16>,
    %cst_15 = arith.constant dense<0.000000e+00> : vector<128xf32>
    %57 = vector.multi_reduction <add>, %52, %cst_15 [0] : vector<128x128xf32> to vector<128xf32>
    %58 = vector.shape_cast %57 : vector<128xf32> to vector<1x128xf32>
    %c0_16 = arith.constant 0 : index
    %c0_17 = arith.constant 0 : index
    %c0_18 = arith.constant 0 : index
    %c0_19 = arith.constant 0 : index
    %59 = vector.load %arg7[%c0_16, %c0_17, %c0_18, %c0_19] : memref<1x1x1x128xf32, #tpu.memory_space<vmem>>, vector<1x1x1x128xf32>
    %60 = vector.shape_cast %59 : vector<1x1x1x128xf32> to vector<1x128xf32>
    %61 = vector.shape_cast %58 : vector<1x128xf32> to vector<1x1x1x128xf32>
    tpu.vector_store %arg7[%c0_16, %c0_17, %c0_18, %c0_19], %61 {strides = array<i32>} : memref<1x1x1x128xf32, #tpu.memory_space<vmem>>, vector<1x1x1x128xf32>,
    %62 = arith.mulf %52, %52 : vector<128x128xf32>
    %cst_20 = arith.constant dense<0.000000e+00> : vector<128xf32>
    %63 = vector.multi_reduction <add>, %62, %cst_20 [0] : vector<128x128xf32> to vector<128xf32>
    %64 = vector.shape_cast %63 : vector<128xf32> to vector<1x128xf32>
    %c0_21 = arith.constant 0 : index
    %c0_22 = arith.constant 0 : index
    %c0_23 = arith.constant 0 : index
    %c0_24 = arith.constant 0 : index
    %65 = vector.load %arg8[%c0_21, %c0_22, %c0_23, %c0_24] : memref<1x1x1x128xf32, #tpu.memory_space<vmem>>, vector<1x1x1x128xf32>
    %66 = vector.shape_cast %65 : vector<1x1x1x128xf32> to vector<1x128xf32>
    %67 = vector.shape_cast %64 : vector<1x128xf32> to vector<1x1x1x128xf32>
    tpu.vector_store %arg8[%c0_21, %c0_22, %c0_23, %c0_24], %67 {strides = array<i32>} : memref<1x1x1x128xf32, #tpu.memory_space<vmem>>, vector<1x1x1x128xf32>,
    return
  }
  func.func @transform_0(%arg0: i32, %arg1: i32) -> (i32, i32, i32, i32) {
    %c0_i32 = arith.constant 0 : i32
    %c0_i32_0 = arith.constant 0 : i32
    %c0_i32_1 = arith.constant 0 : i32
    %c0_i32_2 = arith.constant 0 : i32
    return %arg0, %c0_i32, %c0_i32_0, %c0_i32_1 : i32, i32, i32, i32
  }
  func.func @transform_1(%arg0: i32, %arg1: i32) -> (i32, i32) {
    %c0_i32 = arith.constant 0 : i32
    %c0_i32_0 = arith.constant 0 : i32
    %c0_i32_1 = arith.constant 0 : i32
    return %c0_i32, %c0_i32_0 : i32, i32
  }
  func.func @transform_2(%arg0: i32, %arg1: i32) -> (i32, i32) {
    %c0_i32 = arith.constant 0 : i32
    %c0_i32_0 = arith.constant 0 : i32
    %c0_i32_1 = arith.constant 0 : i32
    return %c0_i32, %c0_i32_0 : i32, i32
  }
  func.func @transform_3(%arg0: i32, %arg1: i32) -> (i32, i32) {
    %c0_i32 = arith.constant 0 : i32
    %c0_i32_0 = arith.constant 0 : i32
    %c0_i32_1 = arith.constant 0 : i32
    return %c0_i32, %c0_i32_0 : i32, i32
  }
  func.func @transform_4(%arg0: i32, %arg1: i32) -> (i32, i32, i32) {
    %c0_i32 = arith.constant 0 : i32
    %c0_i32_0 = arith.constant 0 : i32
    return %arg0, %arg1, %c0_i32 : i32, i32, i32
  }
  func.func @transform_5(%arg0: i32, %arg1: i32) -> (i32, i32, i32, i32) {
    %c0_i32 = arith.constant 0 : i32
    %c0_i32_0 = arith.constant 0 : i32
    %c0_i32_1 = arith.constant 0 : i32
    return %arg0, %arg1, %c0_i32, %c0_i32_0 : i32, i32, i32, i32
  }
  func.func @transform_6(%arg0: i32, %arg1: i32) -> (i32, i32, i32, i32) {
    %c0_i32 = arith.constant 0 : i32
    %c0_i32_0 = arith.constant 0 : i32
    %c0_i32_1 = arith.constant 0 : i32
    return %arg0, %arg1, %c0_i32, %c0_i32_0 : i32, i32, i32, i32
  }
}

module attributes {stable_mosaic.version = 11 : i64} {
  func.func @_bn_nchw_kernel(%arg0: i32, %arg1: i32, %arg2: memref<1x256x128xbf16, #tpu.memory_space<vmem>>, %arg3: memref<1x128xf32, #tpu.memory_space<vmem>>, %arg4: memref<1x128xf32, #tpu.memory_space<vmem>>, %arg5: memref<1x128x256xf32, #tpu.memory_space<vmem>>) attributes {dimension_semantics = [#tpu.dimension_semantics<parallel>, #tpu.dimension_semantics<parallel>], iteration_bounds = array<i64: 2, 1>, scalar_prefetch = 0 : i64, scratch_operands = 0 : i64, tpu.core_type = #tpu.core_type<tc>, window_params = [{transform_indices = @transform_0, window_bounds = array<i64: 1, 256, 128>}, {pipeline_mode = #tpu.pipeline_mode<synchronous>, transform_indices = @transform_1, window_bounds = array<i64: 1, 128>}, {pipeline_mode = #tpu.pipeline_mode<synchronous>, transform_indices = @transform_2, window_bounds = array<i64: 1, 128>}, {transform_indices = @transform_3, window_bounds = array<i64: 1, 128, 256>}]} {
    %c0 = arith.constant 0 : index
    %c0_0 = arith.constant 0 : index
    %c0_1 = arith.constant 0 : index
    %0 = vector.load %arg2[%c0, %c0_0, %c0_1] : memref<1x256x128xbf16, #tpu.memory_space<vmem>>, vector<1x256x128xbf16>
    %1 = vector.shape_cast %0 : vector<1x256x128xbf16> to vector<256x128xbf16>
    %2 = arith.extf %1 : vector<256x128xbf16> to vector<256x128xf32>
    %c0_2 = arith.constant 0 : index
    %c0_3 = arith.constant 0 : index
    %3 = vector.load %arg3[%c0_2, %c0_3] : memref<1x128xf32, #tpu.memory_space<vmem>>, vector<1x128xf32>
    %4 = vector.broadcast %3 : vector<1x128xf32> to vector<256x128xf32>
    %5 = arith.mulf %2, %4 : vector<256x128xf32>
    %c0_4 = arith.constant 0 : index
    %c0_5 = arith.constant 0 : index
    %6 = vector.load %arg4[%c0_4, %c0_5] : memref<1x128xf32, #tpu.memory_space<vmem>>, vector<1x128xf32>
    %7 = vector.broadcast %6 : vector<1x128xf32> to vector<256x128xf32>
    %8 = arith.addf %5, %7 : vector<256x128xf32>
    %9 = tpu.transpose %8, [1, 0] : vector<256x128xf32> -> vector<128x256xf32>
    %c0_6 = arith.constant 0 : index
    %c0_7 = arith.constant 0 : index
    %c0_8 = arith.constant 0 : index
    %10 = vector.load %arg5[%c0_6, %c0_7, %c0_8] : memref<1x128x256xf32, #tpu.memory_space<vmem>>, vector<1x128x256xf32>
    %11 = vector.shape_cast %10 : vector<1x128x256xf32> to vector<128x256xf32>
    %12 = vector.shape_cast %9 : vector<128x256xf32> to vector<1x128x256xf32>
    tpu.vector_store %arg5[%c0_6, %c0_7, %c0_8], %12 {strides = array<i32>} : memref<1x128x256xf32, #tpu.memory_space<vmem>>, vector<1x128x256xf32>,
    return
  }
  func.func @transform_0(%arg0: i32, %arg1: i32) -> (i32, i32, i32) {
    %c0_i32 = arith.constant 0 : i32
    %c0_i32_0 = arith.constant 0 : i32
    return %arg0, %arg1, %c0_i32 : i32, i32, i32
  }
  func.func @transform_1(%arg0: i32, %arg1: i32) -> (i32, i32) {
    %c0_i32 = arith.constant 0 : i32
    %c0_i32_0 = arith.constant 0 : i32
    %c0_i32_1 = arith.constant 0 : i32
    return %c0_i32, %c0_i32_0 : i32, i32
  }
  func.func @transform_2(%arg0: i32, %arg1: i32) -> (i32, i32) {
    %c0_i32 = arith.constant 0 : i32
    %c0_i32_0 = arith.constant 0 : i32
    %c0_i32_1 = arith.constant 0 : i32
    return %c0_i32, %c0_i32_0 : i32, i32
  }
  func.func @transform_3(%arg0: i32, %arg1: i32) -> (i32, i32, i32) {
    %c0_i32 = arith.constant 0 : i32
    %c0_i32_0 = arith.constant 0 : i32
    return %arg0, %c0_i32, %arg1 : i32, i32, i32
  }
}

</mosaic_0001>

<llo_original>
// kernel: squeeze.6
$region0: #{squeeze.6}
  %s0 = inlined_call_operand.vmem [shape: f32[8,3,3], index: 0, kind: input, shape index: {}]
  %s1 = inlined_call_operand.vmem [shape: f32[8,9], index: 1, kind: output, shape index: {}]
  $region1: #{squeeze.6} parent=0
    #allocation0 [shape = 'u8[12288]{0}', space=vmem, size = 0x3000, scoped, tag = 'scoped mem for input reshape']
    %s3 = sshllo.u32 0, 4
    %s4 = smul.addr 4, 2
    %s5 = scalar_lea.vmem %s0, %s4
    %v6 = vld [vmem:[%s5] sm:%s3]
    %s7 = scalar_lea.vmem [#allocation0], 16
    %8 = vst [vmem:[%s7] sm:%s3] %v6
    %s9 = scalar_lea.vmem %s0, 4
    %v10 = vld [vmem:[%s9] sm:%s3]
    %s11 = scalar_lea.vmem [#allocation0], 8
    %12 = vst [vmem:[%s11] sm:%s3] %v10
    %v13 = vld [vmem:[%s0] sm:%s3]
    %14 = vst [vmem:[#allocation0] sm:%s3] %v13
    %v15 = vld [vmem:[#allocation0] sm:$0x7]
    %vm16 = vcmask 64512
    %17 = vst.msk [vmem:[%s1] sm:$0x7] %vm16, %v15
    %s18 = scalar_lea.vmem [#allocation0], 8
    %v19 = vld [vmem:[%s18] sm:$0x7]
    %vm20 = vcmask 64512
    %s21 = scalar_lea.vmem %s1, 3
    %22 = vst.msk [vmem:[%s21] sm:$0x7] %vm20, %v19
    %s23 = scalar_lea.vmem [#allocation0], 16
    %v24 = vld [vmem:[%s23] sm:$0x7]
    %vm25 = vcmask 64512
    %s26 = scalar_lea.vmem %s1, 6
    %27 = vst.msk [vmem:[%s26] sm:$0x7] %vm25, %v24

// kernel: sharp_sep_conv.5
$region0: #{sharp_sep_conv.5}
  #allocation0 [shape = 'u32[]', space=smem, size = 0x4, offset = 0x4, fixed_abs, tag = 'smem constant byte address 0x4 - core index']
  #allocation1 [shape = 'u32[144,128]{1,0:T(1,128)}', space=vmem, size = 0x12000, scoped, tag = 'internal scratch']
  %s0 = inlined_call_operand.vmem [shape: bf16[2,256,128], index: 0, kind: input, shape index: {}]
  %s1 = inlined_call_operand.vmem [shape: f32[1,128], index: 1, kind: input, shape index: {}]
  %s2 = inlined_call_operand.vmem [shape: f32[1,128], index: 2, kind: input, shape index: {}]
  %s3 = inlined_call_operand.vmem [shape: f32[2,128,256], index: 3, kind: output, shape index: {}]
  %s4 = sld [smem:[#allocation0]]
  $region45: #{sharp_sep_conv.5} parent=0
    _
  %s6 = ssub.s32 1, %s4
  %s7 = scalar_select 0, %s6, %s4
  loop: start=0, step=1, limit=4
  $region2: #{sharp_sep_conv.5} parent=0 // loop_pre_header
    _
  $region3: #{sharp_sep_conv.5} parent=0 // loop_header
    %s9 = sphi 0, %s13
    %p10 = scmp.ge.s32.totalorder %s9, 4
    %s16 = sphi 0, %s28
    %s17 = sphi 0, %s24
    %s18 = sphi 0, %s16
    %s19 = sphi 0, %s17
    %s20 = sphi 0, %s18
    %s21 = sphi 0, %s19
    %s33 = sphi 0, %s35
    %s36 = sphi 0, %s33
    %s37 = sphi 0, %s36
    %s53 = sphi 0, %s37
    %s57 = sphi 0, %s57
    %s59 = sphi 0, %s57
    %s60 = sphi 0, %s59
    %s74 = sphi 0, %s60
    %s78 = sphi 0, %s78
    %s80 = sphi 0, %s78
    %s81 = sphi 0, %s80
    %s95 = sphi 0, %s81
    %s103 = sphi 0, %s105
    %s106 = sphi 0, %s103
    %s107 = sphi 0, %s106
    %s123 = sphi 0, %s107
  $region4: #{sharp_sep_conv.5} parent=0 // loop_header_branch
    %12 = sbr.rel (%p10) target = $region8
  $region5: #{sharp_sep_conv.5} parent=0 // loop_body
    %s14 = ssub.s32 %s9, 1
    %s15 = ssub.s32 %s9, 2
    %s22 = sadd.s32 1, %s17
    %p23 = scmp.ge.s32.totalorder %s22, 1
    %s24 = scalar_select %p23, 0, %s22
    %s25 = sadd.s32 1, %s16
    %s26 = scalar_select %p23, %s25, %s16
    %p27 = scmp.ge.s32.totalorder %s26, 2
    %s28 = scalar_select %p27, 0, %s26
    %s29 = ssub.s32 %s16, %s28
    %s30 = ssub.s32 %s17, %s24
    %s31 = sor.u32 %s29, %s30
    %p32 = scmp.eq.s32.totalorder %s31, 0
    %s34 = sadd.s32 %s33, 1
    %s35 = scalar_select %p32, %s33, %s34
    %p38 = pneg %p32
    %p39 = scmp.eq.s32.totalorder %s9, 1
    %p40 = por %p38, %p39
    %p41 = scmp.ne.s32.totalorder %s33, %s36
    %p42 = scmp.eq.s32.totalorder %s9, 0
    %p43 = por %p41, %p42
    %p44 = scmp.ne.s32.totalorder %s33, %s36
    %p45 = scmp.eq.s32.totalorder %s14, 1
    %p46 = por %p44, %p45
    %p47 = scmp.ne.s32.totalorder %s36, %s37
    %p48 = scmp.eq.s32.totalorder %s14, 0
    %p49 = por %p47, %p48
    %p50 = scmp.ne.s32.totalorder %s36, %s37
    %p51 = scmp.eq.s32.totalorder %s15, 1
    %p52 = por %p50, %p51
    %p54 = scmp.ne.s32.totalorder %s37, %s53
    %p55 = scmp.eq.s32.totalorder %s15, 0
    %p56 = por %p54, %p55
    %s58 = sadd.s32 %s57, 1
    %p61 = scmp.eq.s32.totalorder %s9, 1
    %p62 = scmp.ne.s32.totalorder %s57, %s59
    %p63 = scmp.eq.s32.totalorder %s9, 0
    %p64 = por %p62, %p63
    %p65 = scmp.ne.s32.totalorder %s57, %s59
    %p66 = scmp.eq.s32.totalorder %s14, 1
    %p67 = por %p65, %p66
    %p68 = scmp.ne.s32.totalorder %s59, %s60
    %p69 = scmp.eq.s32.totalorder %s14, 0
    %p70 = por %p68, %p69
    %p71 = scmp.ne.s32.totalorder %s59, %s60
    %p72 = scmp.eq.s32.totalorder %s15, 1
    %p73 = por %p71, %p72
    %p75 = scmp.ne.s32.totalorder %s60, %s74
    %p76 = scmp.eq.s32.totalorder %s15, 0
    %p77 = por %p75, %p76
    %s79 = sadd.s32 %s78, 1
    %p82 = scmp.eq.s32.totalorder %s9, 1
    %p83 = scmp.ne.s32.totalorder %s78, %s80
    %p84 = scmp.eq.s32.totalorder %s9, 0
    %p85 = por %p83, %p84
    %p86 = scmp.ne.s32.totalorder %s78, %s80
    %p87 = scmp.eq.s32.totalorder %s14, 1
    %p88 = por %p86, %p87
    %p89 = scmp.ne.s32.totalorder %s80, %s81
    %p90 = scmp.eq.s32.totalorder %s14, 0
    %p91 = por %p89, %p90
    %p92 = scmp.ne.s32.totalorder %s80, %s81
    %p93 = scmp.eq.s32.totalorder %s15, 1
    %p94 = por %p92, %p93
    %p96 = scmp.ne.s32.totalorder %s81, %s95
    %p97 = scmp.eq.s32.totalorder %s15, 0
    %p98 = por %p96, %p97
    %s99 = ssub.s32 %s16, %s28
    %s100 = ssub.s32 %s17, %s24
    %s101 = sor.u32 %s99, %s100
    %p102 = scmp.eq.s32.totalorder %s101, 0
    %s104 = sadd.s32 %s103, 1
    %s105 = scalar_select %p102, %s103, %s104
    %p108 = pneg %p102
    %p109 = scmp.eq.s32.totalorder %s9, 1
    %p110 = por %p108, %p109
    %p111 = scmp.ne.s32.totalorder %s103, %s106
    %p112 = scmp.eq.s32.totalorder %s9, 0
    %p113 = por %p111, %p112
    %p114 = scmp.ne.s32.totalorder %s103, %s106
    %p115 = scmp.eq.s32.totalorder %s14, 1
    %p116 = por %p114, %p115
    %p117 = scmp.ne.s32.totalorder %s106, %s107
    %p118 = scmp.eq.s32.totalorder %s14, 0
    %p119 = por %p117, %p118
    %p120 = scmp.ne.s32.totalorder %s106, %s107
    %p121 = scmp.eq.s32.totalorder %s15, 1
    %p122 = por %p120, %p121
    %p124 = scmp.ne.s32.totalorder %s107, %s123
    %p125 = scmp.eq.s32.totalorder %s15, 0
    %p126 = por %p124, %p125
    %p127 = scmp.le.s32.totalorder 1, %s9
    %p128 = scmp.lt.s32.totalorder %s9, 3
    %p129 = pnand %p127, %p128
    %p130 = pneg %p129
    // Predicated region
    $region9: #{sharp_sep_conv.5} parent=5 // pred_check
      _
    $region10: #{sharp_sep_conv.5} parent=5 // pred_check_branch
      %132 = sbr.rel (%p129) target = $region12
    $region11: #{sharp_sep_conv.5} parent=5 // pred_region
      %s133 = ssub.s32 %s9, 1
      // Predicated region
      $region13: #{sharp_sep_conv.5} parent=11 // pred_check
        %p134 = pneg %p70
      $region14: #{sharp_sep_conv.5} parent=11 // pred_check_branch
        %136 = sbr.rel (%p134) target = $region16
      $region15: #{sharp_sep_conv.5} parent=11 // pred_region
        _
      $region16: #{sharp_sep_conv.5} parent=11 // pred_fallthru
        _
      // Predicated region
      $region17: #{sharp_sep_conv.5} parent=11 // pred_check
        %p137 = pneg %p91
      $region18: #{sharp_sep_conv.5} parent=11 // pred_check_branch
        %139 = sbr.rel (%p137) target = $region20
      $region19: #{sharp_sep_conv.5} parent=11 // pred_region
        _
      $region20: #{sharp_sep_conv.5} parent=11 // pred_fallthru
        _
    $region12: #{sharp_sep_conv.5} parent=5 // pred_fallthru
      _
    %p140 = scmp.lt.s32.totalorder %s9, 2
    // Predicated region
    $region21: #{sharp_sep_conv.5} parent=5 // pred_check
      %p141 = pneg %p140
    $region22: #{sharp_sep_conv.5} parent=5 // pred_check_branch
      %143 = sbr.rel (%p141) target = $region24
    $region23: #{sharp_sep_conv.5} parent=5 // pred_region
      // Predicated region
      $region25: #{sharp_sep_conv.5} parent=23 // pred_check
        %p144 = pneg %p43
      $region26: #{sharp_sep_conv.5} parent=23 // pred_check_branch
        %146 = sbr.rel (%p144) target = $region28
      $region27: #{sharp_sep_conv.5} parent=23 // pred_region
        %s147 = smul.u32 32, %s17
        %p148 = scmp.lt.s32.totalorder %s16, 1
        %s149 = scalar_select %p148, %s16, 1
        %p150 = scmp.lt.s32.totalorder %s147, 31
        %s151 = scalar_select %p150, %s147, 31
        %s152 = smul.addr %s149, 32
        %s153 = sadd.s32 %s151, %s152
        %s154 = smul.addr %s153, 4
        %s155 = scalar_lea.vmem %s0, %s154
        %s156 = smul.u32 32, %s17
      $region28: #{sharp_sep_conv.5} parent=23 // pred_fallthru
        _
    $region24: #{sharp_sep_conv.5} parent=5 // pred_fallthru
      _
    %p157 = scmp.le.s32.totalorder 1, %s9
    %p158 = scmp.lt.s32.totalorder %s9, 3
    %p159 = pnand %p157, %p158
    %p160 = pneg %p159
    // Predicated region
    $region29: #{sharp_sep_conv.5} parent=5 // pred_check
      _
    $region30: #{sharp_sep_conv.5} parent=5 // pred_check_branch
      %162 = sbr.rel (%p159) target = $region32
    $region31: #{sharp_sep_conv.5} parent=5 // pred_region
      %s163 = ssub.s32 %s9, 1
      %s164 = smul.u32 32, %s19
      %p165 = scmp.lt.s32.totalorder %s18, 1
      %s166 = scalar_select %p165, %s18, 1
      %p167 = scmp.lt.s32.totalorder %s164, 31
      %s168 = scalar_select %p167, %s164, 31
      %s169 = smul.addr %s166, 32
      %s170 = sadd.s32 %s168, %s169
      %s171 = smul.addr %s170, 4
      %s172 = scalar_lea.vmem %s0, %s171
      %p173 = pneg %p49
      %p174 = pneg %p46
      %p175 = pneg %p70
      %p176 = pneg %p67
      %p177 = pneg %p91
      %p178 = pneg %p88
      %p179 = pneg %p119
      %p180 = pneg %p116
      %s181 = smul.u32 2, %s19
      %p182 = scmp.lt.s32.totalorder %s18, 1
      %s183 = scalar_select %p182, %s18, 1
      %p184 = scmp.lt.s32.totalorder %s181, 1
      %s185 = scalar_select %p184, %s181, 1
      %s186 = smul.addr %s183, 32
      %s187 = sadd.s32 %s185, %s186
      %s188 = smul.addr %s187, 8
      %s189 = scalar_lea.vmem %s3, %s188
      %s190 = smul.u32 32, %s19
      %p191 = scmp.lt.s32.totalorder %s18, 1
      %s192 = scalar_select %p191, %s18, 1
      %p193 = scmp.lt.s32.totalorder %s190, 31
      %s194 = scalar_select %p193, %s190, 31
      %s195 = smul.addr %s192, 32
      %s196 = sadd.s32 %s194, %s195
      %s197 = smul.addr %s196, 4
      %s198 = scalar_lea.vmem %s0, %s197
      %s199 = smul.u32 32, %s19
      %s200 = smul.u32 2, %s19
      %p201 = scmp.lt.s32.totalorder %s18, 1
      %s202 = scalar_select %p201, %s18, 1
      %p203 = scmp.lt.s32.totalorder %s200, 1
      %s204 = scalar_select %p203, %s200, 1
      %s205 = smul.addr %s202, 32
      %s206 = sadd.s32 %s204, %s205
      %s207 = smul.addr %s206, 8
      %s208 = scalar_lea.vmem %s3, %s207
      %s209 = smul.u32 2, %s19
      %v210 = vld [vmem:[%s198] sm:$0xf]
      %v211 = vld [vmem:[%s198 + $0x4] sm:$0xf]
      %v212 = vld [vmem:[%s198 + $0x8] sm:$0xf]
      %v213 = vld [vmem:[%s198 + $0xc] sm:$0xf]
      %v214 = vld [vmem:[%s198 + $0x10] sm:$0xf]
      %v215 = vld [vmem:[%s198 + $0x14] sm:$0xf]
      %v216 = vld [vmem:[%s198 + $0x18] sm:$0xf]
      %v217 = vld [vmem:[%s198 + $0x1c] sm:$0xf]
      %v218 = vld [vmem:[%s198 + $0x20] sm:$0xf]
      %v219 = vld [vmem:[%s198 + $0x24] sm:$0xf]
      %v220 = vld [vmem:[%s198 + $0x28] sm:$0xf]
      %v221 = vld [vmem:[%s198 + $0x2c] sm:$0xf]
      %v222 = vld [vmem:[%s198 + $0x30] sm:$0xf]
      %v223 = vld [vmem:[%s198 + $0x34] sm:$0xf]
      %v224 = vld [vmem:[%s198 + $0x38] sm:$0xf]
      %v225 = vld [vmem:[%s198 + $0x3c] sm:$0xf]
      %v226 = vld [vmem:[%s198 + $0x40] sm:$0xf]
      %v227 = vld [vmem:[%s198 + $0x44] sm:$0xf]
      %v228 = vld [vmem:[%s198 + $0x48] sm:$0xf]
      %v229 = vld [vmem:[%s198 + $0x4c] sm:$0xf]
      %v230 = vld [vmem:[%s198 + $0x50] sm:$0xf]
      %v231 = vld [vmem:[%s198 + $0x54] sm:$0xf]
      %v232 = vld [vmem:[%s198 + $0x58] sm:$0xf]
      %v233 = vld [vmem:[%s198 + $0x5c] sm:$0xf]
      %v234 = vld [vmem:[%s198 + $0x60] sm:$0xf]
      %v235 = vld [vmem:[%s198 + $0x64] sm:$0xf]
      %v236 = vld [vmem:[%s198 + $0x68] sm:$0xf]
      %v237 = vld [vmem:[%s198 + $0x6c] sm:$0xf]
      %v238 = vld [vmem:[%s198 + $0x70] sm:$0xf]
      %v239 = vld [vmem:[%s198 + $0x74] sm:$0xf]
      %v240 = vld [vmem:[%s198 + $0x78] sm:$0xf]
      %v241 = vld [vmem:[%s198 + $0x7c] sm:$0xf]
      %v242 = vunpack.c.l.bf16 %v210
      %v243 = vunpack.c.l.bf16 %v211
      %v244 = vunpack.c.l.bf16 %v212
      %v245 = vunpack.c.l.bf16 %v213
      %v246 = vunpack.c.l.bf16 %v214
      %v247 = vunpack.c.l.bf16 %v215
      %v248 = vunpack.c.l.bf16 %v216
      %v249 = vunpack.c.l.bf16 %v217
      %v250 = vunpack.c.l.bf16 %v218
      %v251 = vunpack.c.l.bf16 %v219
      %v252 = vunpack.c.l.bf16 %v220
      %v253 = vunpack.c.l.bf16 %v221
      %v254 = vunpack.c.l.bf16 %v222
      %v255 = vunpack.c.l.bf16 %v223
      %v256 = vunpack.c.l.bf16 %v224
      %v257 = vunpack.c.l.bf16 %v225
      %v258 = vunpack.c.l.bf16 %v226
      %v259 = vunpack.c.l.bf16 %v227
      %v260 = vunpack.c.l.bf16 %v228
      %v261 = vunpack.c.l.bf16 %v229
      %v262 = vunpack.c.l.bf16 %v230
      %v263 = vunpack.c.l.bf16 %v231
      %v264 = vunpack.c.l.bf16 %v232
      %v265 = vunpack.c.l.bf16 %v233
      %v266 = vunpack.c.l.bf16 %v234
      %v267 = vunpack.c.l.bf16 %v235
      %v268 = vunpack.c.l.bf16 %v236
      %v269 = vunpack.c.l.bf16 %v237
      %v270 = vunpack.c.l.bf16 %v238
      %v271 = vunpack.c.l.bf16 %v239
      %v272 = vunpack.c.l.bf16 %v240
      %v273 = vunpack.c.l.bf16 %v241
      %v274 = vld [vmem:[%s1] sm:$0x1]
      %v276 = vlaneseq
      %v277 = vshrl.u32 %v276, 7
      %v278 = vsub.s32 0, %v277
      %v279 = vrot.slane %v274, %v278
      %v281 = vmul.f32 %v242, %v279
      %v282 = vmul.f32 %v243, %v279
      %v283 = vmul.f32 %v244, %v279
      %v284 = vmul.f32 %v245, %v279
      %v285 = vmul.f32 %v246, %v279
      %v286 = vmul.f32 %v247, %v279
      %v287 = vmul.f32 %v248, %v279
      %v288 = vmul.f32 %v249, %v279
      %v289 = vmul.f32 %v250, %v279
      %v290 = vmul.f32 %v251, %v279
      %v291 = vmul.f32 %v252, %v279
      %v292 = vmul.f32 %v253, %v279
      %v293 = vmul.f32 %v254, %v279
      %v294 = vmul.f32 %v255, %v279
      %v295 = vmul.f32 %v256, %v279
      %v296 = vmul.f32 %v257, %v279
      %v297 = vmul.f32 %v258, %v279
      %v298 = vmul.f32 %v259, %v279
      %v299 = vmul.f32 %v260, %v279
      %v300 = vmul.f32 %v261, %v279
      %v301 = vmul.f32 %v262, %v279
      %v302 = vmul.f32 %v263, %v279
      %v303 = vmul.f32 %v264, %v279
      %v304 = vmul.f32 %v265, %v279
      %v305 = vmul.f32 %v266, %v279
      %v306 = vmul.f32 %v267, %v279
      %v307 = vmul.f32 %v268, %v279
      %v308 = vmul.f32 %v269, %v279
      %v309 = vmul.f32 %v270, %v279
      %v310 = vmul.f32 %v271, %v279
      %v311 = vmul.f32 %v272, %v279
      %v312 = vmul.f32 %v273, %v279
      %v313 = vld [vmem:[%s2] sm:$0x1]
      %v315 = vlaneseq
      %v316 = vshrl.u32 %v315, 7
      %v317 = vsub.s32 0, %v316
      %v318 = vrot.slane %v313, %v317
      %v320 = vadd.f32 %v281, %v318
      %v321 = vadd.f32 %v282, %v318
      %v322 = vadd.f32 %v283, %v318
      %v323 = vadd.f32 %v284, %v318
      %v324 = vadd.f32 %v285, %v318
      %v325 = vadd.f32 %v286, %v318
      %v326 = vadd.f32 %v287, %v318
      %v327 = vadd.f32 %v288, %v318
      %v328 = vadd.f32 %v289, %v318
      %v329 = vadd.f32 %v290, %v318
      %v330 = vadd.f32 %v291, %v318
      %v331 = vadd.f32 %v292, %v318
      %v332 = vadd.f32 %v293, %v318
      %v333 = vadd.f32 %v294, %v318
      %v334 = vadd.f32 %v295, %v318
      %v335 = vadd.f32 %v296, %v318
      %v336 = vadd.f32 %v297, %v318
      %v337 = vadd.f32 %v298, %v318
      %v338 = vadd.f32 %v299, %v318
      %v339 = vadd.f32 %v300, %v318
      %v340 = vadd.f32 %v301, %v318
      %v341 = vadd.f32 %v302, %v318
      %v342 = vadd.f32 %v303, %v318
      %v343 = vadd.f32 %v304, %v318
      %v344 = vadd.f32 %v305, %v318
      %v345 = vadd.f32 %v306, %v318
      %v346 = vadd.f32 %v307, %v318
      %v347 = vadd.f32 %v308, %v318
      %v348 = vadd.f32 %v309, %v318
      %v349 = vadd.f32 %v310, %v318
      %v350 = vadd.f32 %v311, %v318
      %v351 = vadd.f32 %v312, %v318
      %352 = vxpose.xlu0.b32.start [1/16] %v320, 128
      %353 = vxpose.xlu0.b32.cont [2/16] %v321, 128
      %354 = vxpose.xlu0.b32.cont [3/16] %v322, 128
      %355 = vxpose.xlu0.b32.cont [4/16] %v323, 128
      %356 = vxpose.xlu0.b32.cont [5/16] %v324, 128
      %357 = vxpose.xlu0.b32.cont [6/16] %v325, 128
      %358 = vxpose.xlu0.b32.cont [7/16] %v326, 128
      %359 = vxpose.xlu0.b32.cont [8/16] %v327, 128
      %360 = vxpose.xlu0.b32.cont [9/16] %v328, 128
      %361 = vxpose.xlu0.b32.cont [10/16] %v329, 128
      %362 = vxpose.xlu0.b32.cont [11/16] %v330, 128
      %363 = vxpose.xlu0.b32.cont [12/16] %v331, 128
      %364 = vxpose.xlu0.b32.cont [13/16] %v332, 128
      %365 = vxpose.xlu0.b32.cont [14/16] %v333, 128
      %366 = vxpose.xlu0.b32.cont [15/16] %v334, 128
      %367 = vxpose.xlu0.b32.end [16/16] %v335, 128
      %v368 = vpop.trf.xlu0
      %v369 = vpop.trf.xlu0
      %v370 = vpop.trf.xlu0
      %v371 = vpop.trf.xlu0
      %v372 = vpop.trf.xlu0
      %v373 = vpop.trf.xlu0
      %v374 = vpop.trf.xlu0
      %v375 = vpop.trf.xlu0
      %v376 = vpop.trf.xlu0
      %v377 = vpop.trf.xlu0
      %v378 = vpop.trf.xlu0
      %v379 = vpop.trf.xlu0
      %v380 = vpop.trf.xlu0
      %v381 = vpop.trf.xlu0
      %v382 = vpop.trf.xlu0
      %v383 = vpop.trf.xlu0
      %384 = vxpose.xlu0.b32.start [1/16] %v336, 128
      %385 = vxpose.xlu0.b32.cont [2/16] %v337, 128
      %386 = vxpose.xlu0.b32.cont [3/16] %v338, 128
      %387 = vxpose.xlu0.b32.cont [4/16] %v339, 128
      %388 = vxpose.xlu0.b32.cont [5/16] %v340, 128
      %389 = vxpose.xlu0.b32.cont [6/16] %v341, 128
      %390 = vxpose.xlu0.b32.cont [7/16] %v342, 128
      %391 = vxpose.xlu0.b32.cont [8/16] %v343, 128
      %392 = vxpose.xlu0.b32.cont [9/16] %v344, 128
      %393 = vxpose.xlu0.b32.cont [10/16] %v345, 128
      %394 = vxpose.xlu0.b32.cont [11/16] %v346, 128
      %395 = vxpose.xlu0.b32.cont [12/16] %v347, 128
      %396 = vxpose.xlu0.b32.cont [13/16] %v348, 128
      %397 = vxpose.xlu0.b32.cont [14/16] %v349, 128
      %398 = vxpose.xlu0.b32.cont [15/16] %v350, 128
      %399 = vxpose.xlu0.b32.end [16/16] %v351, 128
      %v400 = vpop.trf.xlu0
      %v401 = vpop.trf.xlu0
      %v402 = vpop.trf.xlu0
      %v403 = vpop.trf.xlu0
      %v404 = vpop.trf.xlu0
      %v405 = vpop.trf.xlu0
      %v406 = vpop.trf.xlu0
      %v407 = vpop.trf.xlu0
      %v408 = vpop.trf.xlu0
      %v409 = vpop.trf.xlu0
      %v410 = vpop.trf.xlu0
      %v411 = vpop.trf.xlu0
      %v412 = vpop.trf.xlu0
      %v413 = vpop.trf.xlu0
      %v414 = vpop.trf.xlu0
      %v415 = vpop.trf.xlu0
      %416 = vst [vmem:[%s208] sm:$0xff] %v368
      %417 = vst [vmem:[%s208 + $0x8] sm:$0xff] %v400
      %418 = vst [vmem:[%s208 + $0x10] sm:$0xff] %v369
      %419 = vst [vmem:[%s208 + $0x18] sm:$0xff] %v401
      %420 = vst [vmem:[%s208 + $0x20] sm:$0xff] %v370
      %421 = vst [vmem:[%s208 + $0x28] sm:$0xff] %v402
      %422 = vst [vmem:[%s208 + $0x30] sm:$0xff] %v371
      %423 = vst [vmem:[%s208 + $0x38] sm:$0xff] %v403
      %424 = vst [vmem:[%s208 + $0x40] sm:$0xff] %v372
      %425 = vst [vmem:[%s208 + $0x48] sm:$0xff] %v404
      %426 = vst [vmem:[%s208 + $0x50] sm:$0xff] %v373
      %427 = vst [vmem:[%s208 + $0x58] sm:$0xff] %v405
      %428 = vst [vmem:[%s208 + $0x60] sm:$0xff] %v374
      %429 = vst [vmem:[%s208 + $0x68] sm:$0xff] %v406
      %430 = vst [vmem:[%s208 + $0x70] sm:$0xff] %v375
      %431 = vst [vmem:[%s208 + $0x78] sm:$0xff] %v407
      %432 = vst [vmem:[%s208 + $0x80] sm:$0xff] %v376
      %433 = vst [vmem:[%s208 + $0x88] sm:$0xff] %v408
      %434 = vst [vmem:[%s208 + $0x90] sm:$0xff] %v377
      %435 = vst [vmem:[%s208 + $0x98] sm:$0xff] %v409
      %436 = vst [vmem:[%s208 + $0xa0] sm:$0xff] %v378
      %437 = vst [vmem:[%s208 + $0xa8] sm:$0xff] %v410
      %438 = vst [vmem:[%s208 + $0xb0] sm:$0xff] %v379
      %439 = vst [vmem:[%s208 + $0xb8] sm:$0xff] %v411
      %440 = vst [vmem:[%s208 + $0xc0] sm:$0xff] %v380
      %441 = vst [vmem:[%s208 + $0xc8] sm:$0xff] %v412
      %442 = vst [vmem:[%s208 + $0xd0] sm:$0xff] %v381
      %443 = vst [vmem:[%s208 + $0xd8] sm:$0xff] %v413
      %444 = vst [vmem:[%s208 + $0xe0] sm:$0xff] %v382
      %445 = vst [vmem:[%s208 + $0xe8] sm:$0xff] %v414
      %446 = vst [vmem:[%s208 + $0xf0] sm:$0xff] %v383
      %447 = vst [vmem:[%s208 + $0xf8] sm:$0xff] %v415
      %s448 = smul.u32 2, %s19
      %p449 = scmp.lt.s32.totalorder %s18, 1
      %s450 = scalar_select %p449, %s18, 1
      %p451 = scmp.lt.s32.totalorder %s448, 1
      %s452 = scalar_select %p451, %s448, 1
      %s453 = smul.addr %s450, 32
      %s454 = sadd.s32 %s452, %s453
      %s455 = smul.addr %s454, 8
      %s456 = scalar_lea.vmem %s3, %s455
      // Predicated region
      $region33: #{sharp_sep_conv.5} parent=31 // pred_check
        %p457 = pneg %p116
      $region34: #{sharp_sep_conv.5} parent=31 // pred_check_branch
        %459 = sbr.rel (%p457) target = $region36
      $region35: #{sharp_sep_conv.5} parent=31 // pred_region
        %s460 = smul.u32 2, %s19
      $region36: #{sharp_sep_conv.5} parent=31 // pred_fallthru
        _
    $region32: #{sharp_sep_conv.5} parent=5 // pred_fallthru
      _
    %p461 = scmp.le.s32.totalorder 2, %s9
    // Predicated region
    $region37: #{sharp_sep_conv.5} parent=5 // pred_check
      %p462 = pneg %p461
    $region38: #{sharp_sep_conv.5} parent=5 // pred_check_branch
      %464 = sbr.rel (%p462) target = $region40
    $region39: #{sharp_sep_conv.5} parent=5 // pred_region
      %s465 = ssub.s32 %s9, 2
      // Predicated region
      $region41: #{sharp_sep_conv.5} parent=39 // pred_check
        %p466 = pneg %p122
      $region42: #{sharp_sep_conv.5} parent=39 // pred_check_branch
        %468 = sbr.rel (%p466) target = $region44
      $region43: #{sharp_sep_conv.5} parent=39 // pred_region
        %s469 = smul.u32 2, %s21
        %p470 = scmp.lt.s32.totalorder %s20, 1
        %s471 = scalar_select %p470, %s20, 1
        %p472 = scmp.lt.s32.totalorder %s469, 1
        %s473 = scalar_select %p472, %s469, 1
        %s474 = smul.addr %s471, 32
        %s475 = sadd.s32 %s473, %s474
        %s476 = smul.addr %s475, 8
        %s477 = scalar_lea.vmem %s3, %s476
      $region44: #{sharp_sep_conv.5} parent=39 // pred_fallthru
        _
    $region40: #{sharp_sep_conv.5} parent=5 // pred_fallthru
      _
  $region6: #{sharp_sep_conv.5} parent=0 // loop_footer
    %s13 = sadd.s32 1, %s9
  $region7: #{sharp_sep_conv.5} parent=0 // loop_footer_branch
    %8 = sbr.rel target = $region3
  $region8: #{sharp_sep_conv.5} parent=0 // loop_exit
    _

// kernel: sharp_sep_conv.3
$region0: #{sharp_sep_conv.3}
  #allocation0 [shape = 'u32[]', space=smem, size = 0x4, offset = 0x4, fixed_abs, tag = 'smem constant byte address 0x4 - core index']
  #allocation1 [shape = 'u32[144,128]{1,0:T(1,128)}', space=vmem, size = 0x12000, scoped, tag = 'internal scratch']
  %s0 = inlined_call_operand.vmem [shape: bf16[2,18,18,128], index: 0, kind: input, shape index: {}]
  %s1 = inlined_call_operand.vmem [shape: bf16[1,128], index: 1, kind: input, shape index: {}]
  %s2 = inlined_call_operand.vmem [shape: bf16[1,128], index: 2, kind: input, shape index: {}]
  %s3 = inlined_call_operand.vmem [shape: bf16[1152,128], index: 3, kind: input, shape index: {}]
  %s4 = inlined_call_operand.vmem [shape: bf16[2,256,128], index: 4, kind: output, shape index: {0}]
  %s5 = inlined_call_operand.vmem [shape: f32[2,2,1,128], index: 5, kind: output, shape index: {1}]
  %s6 = inlined_call_operand.vmem [shape: f32[2,2,1,128], index: 6, kind: output, shape index: {2}]
  %7 = xla_tuple %s4, %s5, %s6
  %s8 = sld [smem:[#allocation0]]
  $region65: #{sharp_sep_conv.3} parent=0
    _
  %s10 = ssub.s32 1, %s8
  %s11 = scalar_select 0, %s10, %s8
  loop: start=0, step=1, limit=6
  $region2: #{sharp_sep_conv.3} parent=0 // loop_pre_header
    _
  $region3: #{sharp_sep_conv.3} parent=0 // loop_header
    %s13 = sphi 0, %s17
    %p14 = scmp.ge.s32.totalorder %s13, 6
    %s20 = sphi 0, %s32
    %s21 = sphi 0, %s28
    %s22 = sphi 0, %s20
    %s23 = sphi 0, %s21
    %s24 = sphi 0, %s22
    %s25 = sphi 0, %s23
    %s35 = sphi 0, %s37
    %s38 = sphi 0, %s35
    %s39 = sphi 0, %s38
    %s55 = sphi 0, %s39
    %s59 = sphi 0, %s59
    %s61 = sphi 0, %s59
    %s62 = sphi 0, %s61
    %s76 = sphi 0, %s62
    %s80 = sphi 0, %s80
    %s82 = sphi 0, %s80
    %s83 = sphi 0, %s82
    %s97 = sphi 0, %s83
    %s101 = sphi 0, %s101
    %s103 = sphi 0, %s101
    %s104 = sphi 0, %s103
    %s118 = sphi 0, %s104
    %s126 = sphi 0, %s128
    %s129 = sphi 0, %s126
    %s130 = sphi 0, %s129
    %s146 = sphi 0, %s130
    %s154 = sphi 0, %s156
    %s157 = sphi 0, %s154
    %s158 = sphi 0, %s157
    %s174 = sphi 0, %s158
    %s182 = sphi 0, %s184
    %s185 = sphi 0, %s182
    %s186 = sphi 0, %s185
    %s202 = sphi 0, %s186
  $region4: #{sharp_sep_conv.3} parent=0 // loop_header_branch
    %16 = sbr.rel (%p14) target = $region8
  $region5: #{sharp_sep_conv.3} parent=0 // loop_body
    %s18 = ssub.s32 %s13, 1
    %s19 = ssub.s32 %s13, 2
    %s26 = sadd.s32 1, %s21
    %p27 = scmp.ge.s32.totalorder %s26, 2
    %s28 = scalar_select %p27, 0, %s26
    %s29 = sadd.s32 1, %s20
    %s30 = scalar_select %p27, %s29, %s20
    %p31 = scmp.ge.s32.totalorder %s30, 2
    %s32 = scalar_select %p31, 0, %s30
    %s33 = ssub.s32 %s20, %s32
    %p34 = scmp.eq.s32.totalorder %s33, 0
    %s36 = sadd.s32 %s35, 1
    %s37 = scalar_select %p34, %s35, %s36
    %p40 = pneg %p34
    %p41 = scmp.eq.s32.totalorder %s13, 3
    %p42 = por %p40, %p41
    %p43 = scmp.ne.s32.totalorder %s35, %s38
    %p44 = scmp.eq.s32.totalorder %s13, 0
    %p45 = por %p43, %p44
    %p46 = scmp.ne.s32.totalorder %s35, %s38
    %p47 = scmp.eq.s32.totalorder %s18, 3
    %p48 = por %p46, %p47
    %p49 = scmp.ne.s32.totalorder %s38, %s39
    %p50 = scmp.eq.s32.totalorder %s18, 0
    %p51 = por %p49, %p50
    %p52 = scmp.ne.s32.totalorder %s38, %s39
    %p53 = scmp.eq.s32.totalorder %s19, 3
    %p54 = por %p52, %p53
    %p56 = scmp.ne.s32.totalorder %s39, %s55
    %p57 = scmp.eq.s32.totalorder %s19, 0
    %p58 = por %p56, %p57
    %s60 = sadd.s32 %s59, 1
    %p63 = scmp.eq.s32.totalorder %s13, 3
    %p64 = scmp.ne.s32.totalorder %s59, %s61
    %p65 = scmp.eq.s32.totalorder %s13, 0
    %p66 = por %p64, %p65
    %p67 = scmp.ne.s32.totalorder %s59, %s61
    %p68 = scmp.eq.s32.totalorder %s18, 3
    %p69 = por %p67, %p68
    %p70 = scmp.ne.s32.totalorder %s61, %s62
    %p71 = scmp.eq.s32.totalorder %s18, 0
    %p72 = por %p70, %p71
    %p73 = scmp.ne.s32.totalorder %s61, %s62
    %p74 = scmp.eq.s32.totalorder %s19, 3
    %p75 = por %p73, %p74
    %p77 = scmp.ne.s32.totalorder %s62, %s76
    %p78 = scmp.eq.s32.totalorder %s19, 0
    %p79 = por %p77, %p78
    %s81 = sadd.s32 %s80, 1
    %p84 = scmp.eq.s32.totalorder %s13, 3
    %p85 = scmp.ne.s32.totalorder %s80, %s82
    %p86 = scmp.eq.s32.totalorder %s13, 0
    %p87 = por %p85, %p86
    %p88 = scmp.ne.s32.totalorder %s80, %s82
    %p89 = scmp.eq.s32.totalorder %s18, 3
    %p90 = por %p88, %p89
    %p91 = scmp.ne.s32.totalorder %s82, %s83
    %p92 = scmp.eq.s32.totalorder %s18, 0
    %p93 = por %p91, %p92
    %p94 = scmp.ne.s32.totalorder %s82, %s83
    %p95 = scmp.eq.s32.totalorder %s19, 3
    %p96 = por %p94, %p95
    %p98 = scmp.ne.s32.totalorder %s83, %s97
    %p99 = scmp.eq.s32.totalorder %s19, 0
    %p100 = por %p98, %p99
    %s102 = sadd.s32 %s101, 1
    %p105 = scmp.eq.s32.totalorder %s13, 3
    %p106 = scmp.ne.s32.totalorder %s101, %s103
    %p107 = scmp.eq.s32.totalorder %s13, 0
    %p108 = por %p106, %p107
    %p109 = scmp.ne.s32.totalorder %s101, %s103
    %p110 = scmp.eq.s32.totalorder %s18, 3
    %p111 = por %p109, %p110
    %p112 = scmp.ne.s32.totalorder %s103, %s104
    %p113 = scmp.eq.s32.totalorder %s18, 0
    %p114 = por %p112, %p113
    %p115 = scmp.ne.s32.totalorder %s103, %s104
    %p116 = scmp.eq.s32.totalorder %s19, 3
    %p117 = por %p115, %p116
    %p119 = scmp.ne.s32.totalorder %s104, %s118
    %p120 = scmp.eq.s32.totalorder %s19, 0
    %p121 = por %p119, %p120
    %s122 = ssub.s32 %s20, %s32
    %s123 = ssub.s32 %s21, %s28
    %s124 = sor.u32 %s122, %s123
    %p125 = scmp.eq.s32.totalorder %s124, 0
    %s127 = sadd.s32 %s126, 1
    %s128 = scalar_select %p125, %s126, %s127
    %p131 = pneg %p125
    %p132 = scmp.eq.s32.totalorder %s13, 3
    %p133 = por %p131, %p132
    %p134 = scmp.ne.s32.totalorder %s126, %s129
    %p135 = scmp.eq.s32.totalorder %s13, 0
    %p136 = por %p134, %p135
    %p137 = scmp.ne.s32.totalorder %s126, %s129
    %p138 = scmp.eq.s32.totalorder %s18, 3
    %p139 = por %p137, %p138
    %p140 = scmp.ne.s32.totalorder %s129, %s130
    %p141 = scmp.eq.s32.totalorder %s18, 0
    %p142 = por %p140, %p141
    %p143 = scmp.ne.s32.totalorder %s129, %s130
    %p144 = scmp.eq.s32.totalorder %s19, 3
    %p145 = por %p143, %p144
    %p147 = scmp.ne.s32.totalorder %s130, %s146
    %p148 = scmp.eq.s32.totalorder %s19, 0
    %p149 = por %p147, %p148
    %s150 = ssub.s32 %s20, %s32
    %s151 = ssub.s32 %s21, %s28
    %s152 = sor.u32 %s150, %s151
    %p153 = scmp.eq.s32.totalorder %s152, 0
    %s155 = sadd.s32 %s154, 1
    %s156 = scalar_select %p153, %s154, %s155
    %p159 = pneg %p153
    %p160 = scmp.eq.s32.totalorder %s13, 3
    %p161 = por %p159, %p160
    %p162 = scmp.ne.s32.totalorder %s154, %s157
    %p163 = scmp.eq.s32.totalorder %s13, 0
    %p164 = por %p162, %p163
    %p165 = scmp.ne.s32.totalorder %s154, %s157
    %p166 = scmp.eq.s32.totalorder %s18, 3
    %p167 = por %p165, %p166
    %p168 = scmp.ne.s32.totalorder %s157, %s158
    %p169 = scmp.eq.s32.totalorder %s18, 0
    %p170 = por %p168, %p169
    %p171 = scmp.ne.s32.totalorder %s157, %s158
    %p172 = scmp.eq.s32.totalorder %s19, 3
    %p173 = por %p171, %p172
    %p175 = scmp.ne.s32.totalorder %s158, %s174
    %p176 = scmp.eq.s32.totalorder %s19, 0
    %p177 = por %p175, %p176
    %s178 = ssub.s32 %s20, %s32
    %s179 = ssub.s32 %s21, %s28
    %s180 = sor.u32 %s178, %s179
    %p181 = scmp.eq.s32.totalorder %s180, 0
    %s183 = sadd.s32 %s182, 1
    %s184 = scalar_select %p181, %s182, %s183
    %p187 = pneg %p181
    %p188 = scmp.eq.s32.totalorder %s13, 3
    %p189 = por %p187, %p188
    %p190 = scmp.ne.s32.totalorder %s182, %s185
    %p191 = scmp.eq.s32.totalorder %s13, 0
    %p192 = por %p190, %p191
    %p193 = scmp.ne.s32.totalorder %s182, %s185
    %p194 = scmp.eq.s32.totalorder %s18, 3
    %p195 = por %p193, %p194
    %p196 = scmp.ne.s32.totalorder %s185, %s186
    %p197 = scmp.eq.s32.totalorder %s18, 0
    %p198 = por %p196, %p197
    %p199 = scmp.ne.s32.totalorder %s185, %s186
    %p200 = scmp.eq.s32.totalorder %s19, 3
    %p201 = por %p199, %p200
    %p203 = scmp.ne.s32.totalorder %s186, %s202
    %p204 = scmp.eq.s32.totalorder %s19, 0
    %p205 = por %p203, %p204
    %p206 = scmp.le.s32.totalorder 1, %s13
    %p207 = scmp.lt.s32.totalorder %s13, 5
    %p208 = pnand %p206, %p207
    %p209 = pneg %p208
    // Predicated region
    $region9: #{sharp_sep_conv.3} parent=5 // pred_check
      _
    $region10: #{sharp_sep_conv.3} parent=5 // pred_check_branch
      %211 = sbr.rel (%p208) target = $region12
    $region11: #{sharp_sep_conv.3} parent=5 // pred_region
      %s212 = ssub.s32 %s13, 1
      // Predicated region
      $region13: #{sharp_sep_conv.3} parent=11 // pred_check
        %p213 = pneg %p72
      $region14: #{sharp_sep_conv.3} parent=11 // pred_check_branch
        %215 = sbr.rel (%p213) target = $region16
      $region15: #{sharp_sep_conv.3} parent=11 // pred_region
        _
      $region16: #{sharp_sep_conv.3} parent=11 // pred_fallthru
        _
      // Predicated region
      $region17: #{sharp_sep_conv.3} parent=11 // pred_check
        %p216 = pneg %p93
      $region18: #{sharp_sep_conv.3} parent=11 // pred_check_branch
        %218 = sbr.rel (%p216) target = $region20
      $region19: #{sharp_sep_conv.3} parent=11 // pred_region
        _
      $region20: #{sharp_sep_conv.3} parent=11 // pred_fallthru
        _
      // Predicated region
      $region21: #{sharp_sep_conv.3} parent=11 // pred_check
        %p219 = pneg %p114
      $region22: #{sharp_sep_conv.3} parent=11 // pred_check_branch
        %221 = sbr.rel (%p219) target = $region24
      $region23: #{sharp_sep_conv.3} parent=11 // pred_region
        _
      $region24: #{sharp_sep_conv.3} parent=11 // pred_fallthru
        _
    $region12: #{sharp_sep_conv.3} parent=5 // pred_fallthru
      _
    %p222 = scmp.lt.s32.totalorder %s13, 4
    // Predicated region
    $region25: #{sharp_sep_conv.3} parent=5 // pred_check
      %p223 = pneg %p222
    $region26: #{sharp_sep_conv.3} parent=5 // pred_check_branch
      %225 = sbr.rel (%p223) target = $region28
    $region27: #{sharp_sep_conv.3} parent=5 // pred_region
      // Predicated region
      $region29: #{sharp_sep_conv.3} parent=27 // pred_check
        %p226 = pneg %p45
      $region30: #{sharp_sep_conv.3} parent=27 // pred_check_branch
        %228 = sbr.rel (%p226) target = $region32
      $region31: #{sharp_sep_conv.3} parent=27 // pred_region
        %p229 = scmp.lt.s32.totalorder %s20, 1
        %s230 = scalar_select %p229, %s20, 1
        %s231 = smul.addr %s230, 54
        %s232 = smul.addr %s231, 4
        %s233 = scalar_lea.vmem %s0, %s232
      $region32: #{sharp_sep_conv.3} parent=27 // pred_fallthru
        _
    $region28: #{sharp_sep_conv.3} parent=5 // pred_fallthru
      _
    %p234 = scmp.le.s32.totalorder 1, %s13
    %p235 = scmp.lt.s32.totalorder %s13, 5
    %p236 = pnand %p234, %p235
    %p237 = pneg %p236
    // Predicated region
    $region33: #{sharp_sep_conv.3} parent=5 // pred_check
      _
    $region34: #{sharp_sep_conv.3} parent=5 // pred_check_branch
      %239 = sbr.rel (%p236) target = $region36
    $region35: #{sharp_sep_conv.3} parent=5 // pred_region
      %s240 = ssub.s32 %s13, 1
      %p241 = scmp.lt.s32.totalorder %s22, 1
      %s242 = scalar_select %p241, %s22, 1
      %s243 = smul.addr %s242, 54
      %s244 = smul.addr %s243, 4
      %s245 = scalar_lea.vmem %s0, %s244
      %p246 = pneg %p51
      %p247 = pneg %p48
      %p248 = pneg %p72
      %p249 = pneg %p69
      %p250 = pneg %p93
      %p251 = pneg %p90
      %p252 = pneg %p114
      %p253 = pneg %p111
      %p254 = pneg %p142
      %p255 = pneg %p139
      %s256 = smul.u32 16, %s23
      %p257 = scmp.lt.s32.totalorder %s22, 1
      %s258 = scalar_select %p257, %s22, 1
      %p259 = scmp.lt.s32.totalorder %s256, 31
      %s260 = scalar_select %p259, %s256, 31
      %s261 = smul.addr %s258, 32
      %s262 = sadd.s32 %s260, %s261
      %s263 = smul.addr %s262, 4
      %s264 = scalar_lea.vmem %s4, %s263
      %p265 = pneg %p170
      %p266 = pneg %p167
      %p267 = scmp.lt.s32.totalorder %s22, 1
      %s268 = scalar_select %p267, %s22, 1
      %p269 = scmp.lt.s32.totalorder %s23, 1
      %s270 = scalar_select %p269, %s23, 1
      %s271 = smul.addr %s268, 2
      %s272 = sadd.s32 %s270, %s271
      %s273 = scalar_lea.vmem %s5, %s272
      %p274 = pneg %p198
      %p275 = pneg %p195
      %p276 = scmp.lt.s32.totalorder %s22, 1
      %s277 = scalar_select %p276, %s22, 1
      %p278 = scmp.lt.s32.totalorder %s23, 1
      %s279 = scalar_select %p278, %s23, 1
      %s280 = smul.addr %s277, 2
      %s281 = sadd.s32 %s279, %s280
      %s282 = scalar_lea.vmem %s6, %s281
      %p283 = scmp.lt.s32.totalorder %s22, 1
      %s284 = scalar_select %p283, %s22, 1
      %s285 = smul.addr %s284, 54
      %s286 = smul.addr %s285, 4
      %s287 = scalar_lea.vmem %s0, %s286
      %s288 = smul.u32 16, %s23
      %p289 = scmp.lt.s32.totalorder %s22, 1
      %s290 = scalar_select %p289, %s22, 1
      %p291 = scmp.lt.s32.totalorder %s288, 31
      %s292 = scalar_select %p291, %s288, 31
      %s293 = smul.addr %s290, 32
      %s294 = sadd.s32 %s292, %s293
      %s295 = smul.addr %s294, 4
      %s296 = scalar_lea.vmem %s4, %s295
      %s297 = smul.u32 16, %s23
      %p298 = scmp.lt.s32.totalorder %s22, 1
      %s299 = scalar_select %p298, %s22, 1
      %p300 = scmp.lt.s32.totalorder %s23, 1
      %s301 = scalar_select %p300, %s23, 1
      %s302 = smul.addr %s299, 2
      %s303 = sadd.s32 %s301, %s302
      %s304 = scalar_lea.vmem %s5, %s303
      %p305 = scmp.lt.s32.totalorder %s22, 1
      %s306 = scalar_select %p305, %s22, 1
      %p307 = scmp.lt.s32.totalorder %s23, 1
      %s308 = scalar_select %p307, %s23, 1
      %s309 = smul.addr %s306, 2
      %s310 = sadd.s32 %s308, %s309
      %s311 = scalar_lea.vmem %s6, %s310
      %s313 = smul.u32 %s23, 8
      %s314 = smul.u32 %s313, 3
      %s315 = smul.addr %s314, 4
      %s316 = scalar_lea.vmem %s287, %s315
      %v317 = vld [vmem:[%s316] sm:$0xf]
      %v318 = vld [vmem:[%s316 + $0x4] sm:$0xf]
      %v319 = vld [vmem:[%s316 + $0x8] sm:$0x1]
      %v320 = vld [vmem:[%s316 + $0xc] sm:$0xf]
      %v321 = vld [vmem:[%s316 + $0x10] sm:$0xf]
      %v322 = vld [vmem:[%s316 + $0x14] sm:$0x1]
      %v323 = vld [vmem:[%s316 + $0x18] sm:$0xf]
      %v324 = vld [vmem:[%s316 + $0x1c] sm:$0xf]
      %v325 = vld [vmem:[%s316 + $0x20] sm:$0x1]
      %v326 = vld [vmem:[%s316 + $0x24] sm:$0xf]
      %v327 = vld [vmem:[%s316 + $0x28] sm:$0xf]
      %v328 = vld [vmem:[%s316 + $0x2c] sm:$0x1]
      %v329 = vld [vmem:[%s316 + $0x30] sm:$0xf]
      %v330 = vld [vmem:[%s316 + $0x34] sm:$0xf]
      %v331 = vld [vmem:[%s316 + $0x38] sm:$0x1]
      %v332 = vld [vmem:[%s316 + $0x3c] sm:$0xf]
      %v333 = vld [vmem:[%s316 + $0x40] sm:$0xf]
      %v334 = vld [vmem:[%s316 + $0x44] sm:$0x1]
      %v335 = vld [vmem:[%s316 + $0x48] sm:$0xf]
      %v336 = vld [vmem:[%s316 + $0x4c] sm:$0xf]
      %v337 = vld [vmem:[%s316 + $0x50] sm:$0x1]
      %v338 = vld [vmem:[%s316 + $0x54] sm:$0xf]
      %v339 = vld [vmem:[%s316 + $0x58] sm:$0xf]
      %v340 = vld [vmem:[%s316 + $0x5c] sm:$0x1]
      %v341 = vld [vmem:[%s316 + $0x60] sm:$0xf]
      %v342 = vld [vmem:[%s316 + $0x64] sm:$0xf]
      %v343 = vld [vmem:[%s316 + $0x68] sm:$0x1]
      %v344 = vld [vmem:[%s316 + $0x6c] sm:$0xf]
      %v345 = vld [vmem:[%s316 + $0x70] sm:$0xf]
      %v346 = vld [vmem:[%s316 + $0x74] sm:$0x1]
      %v347 = vld [vmem:[%s1] sm:$0x1]
      %v348 = vld [vmem:[%s2] sm:$0x1]
      %v350 = vpack.i.b16 %v347, %v347
      %v352 = vlaneseq
      %v353 = vshrl.u32 %v352, 7
      %v354 = vsub.s32 0, %v353
      %v355 = vrot.slane %v350, %v354
      %v357 = vunpack.c.l.b16 %v355
      %v358 = vpack.c.b16 %v357, %v357
      %v360 = vmul.bf16 %v317, %v358
      %v361 = vmul.bf16 %v318, %v358
      %v362 = vmul.bf16 %v319, %v358
      %v363 = vmul.bf16 %v320, %v358
      %v364 = vmul.bf16 %v321, %v358
      %v365 = vmul.bf16 %v322, %v358
      %v366 = vmul.bf16 %v323, %v358
      %v367 = vmul.bf16 %v324, %v358
      %v368 = vmul.bf16 %v325, %v358
      %v369 = vmul.bf16 %v326, %v358
      %v370 = vmul.bf16 %v327, %v358
      %v371 = vmul.bf16 %v328, %v358
      %v372 = vmul.bf16 %v329, %v358
      %v373 = vmul.bf16 %v330, %v358
      %v374 = vmul.bf16 %v331, %v358
      %v375 = vmul.bf16 %v332, %v358
      %v376 = vmul.bf16 %v333, %v358
      %v377 = vmul.bf16 %v334, %v358
      %v378 = vmul.bf16 %v335, %v358
      %v379 = vmul.bf16 %v336, %v358
      %v380 = vmul.bf16 %v337, %v358
      %v381 = vmul.bf16 %v338, %v358
      %v382 = vmul.bf16 %v339, %v358
      %v383 = vmul.bf16 %v340, %v358
      %v384 = vmul.bf16 %v341, %v358
      %v385 = vmul.bf16 %v342, %v358
      %v386 = vmul.bf16 %v343, %v358
      %v387 = vmul.bf16 %v344, %v358
      %v388 = vmul.bf16 %v345, %v358
      %v389 = vmul.bf16 %v346, %v358
      %v391 = vpack.i.b16 %v348, %v348
      %v393 = vlaneseq
      %v394 = vshrl.u32 %v393, 7
      %v395 = vsub.s32 0, %v394
      %v396 = vrot.slane %v391, %v395
      %v398 = vunpack.c.l.b16 %v396
      %v399 = vpack.c.b16 %v398, %v398
      %v401 = vadd.bf16 %v360, %v399
      %v402 = vadd.bf16 %v361, %v399
      %v403 = vadd.bf16 %v362, %v399
      %v404 = vadd.bf16 %v363, %v399
      %v405 = vadd.bf16 %v364, %v399
      %v406 = vadd.bf16 %v365, %v399
      %v407 = vadd.bf16 %v366, %v399
      %v408 = vadd.bf16 %v367, %v399
      %v409 = vadd.bf16 %v368, %v399
      %v410 = vadd.bf16 %v369, %v399
      %v411 = vadd.bf16 %v370, %v399
      %v412 = vadd.bf16 %v371, %v399
      %v413 = vadd.bf16 %v372, %v399
      %v414 = vadd.bf16 %v373, %v399
      %v415 = vadd.bf16 %v374, %v399
      %v416 = vadd.bf16 %v375, %v399
      %v417 = vadd.bf16 %v376, %v399
      %v418 = vadd.bf16 %v377, %v399
      %v419 = vadd.bf16 %v378, %v399
      %v420 = vadd.bf16 %v379, %v399
      %v421 = vadd.bf16 %v380, %v399
      %v422 = vadd.bf16 %v381, %v399
      %v423 = vadd.bf16 %v382, %v399
      %v424 = vadd.bf16 %v383, %v399
      %v425 = vadd.bf16 %v384, %v399
      %v426 = vadd.bf16 %v385, %v399
      %v427 = vadd.bf16 %v386, %v399
      %v428 = vadd.bf16 %v387, %v399
      %v429 = vadd.bf16 %v388, %v399
      %v430 = vadd.bf16 %v389, %v399
      %v431 = vmax.bf16 %v401, 0
      %v432 = vmax.bf16 %v402, 0
      %v433 = vmax.bf16 %v403, 0
      %v434 = vmax.bf16 %v404, 0
      %v435 = vmax.bf16 %v405, 0
      %v436 = vmax.bf16 %v406, 0
      %v437 = vmax.bf16 %v407, 0
      %v438 = vmax.bf16 %v408, 0
      %v439 = vmax.bf16 %v409, 0
      %v440 = vmax.bf16 %v410, 0
      %v441 = vmax.bf16 %v411, 0
      %v442 = vmax.bf16 %v412, 0
      %v443 = vmax.bf16 %v413, 0
      %v444 = vmax.bf16 %v414, 0
      %v445 = vmax.bf16 %v415, 0
      %v446 = vmax.bf16 %v416, 0
      %v447 = vmax.bf16 %v417, 0
      %v448 = vmax.bf16 %v418, 0
      %v449 = vmax.bf16 %v419, 0
      %v450 = vmax.bf16 %v420, 0
      %v451 = vmax.bf16 %v421, 0
      %v452 = vmax.bf16 %v422, 0
      %v453 = vmax.bf16 %v423, 0
      %v454 = vmax.bf16 %v424, 0
      %v455 = vmax.bf16 %v425, 0
      %v456 = vmax.bf16 %v426, 0
      %v457 = vmax.bf16 %v427, 0
      %v458 = vmax.bf16 %v428, 0
      %v459 = vmax.bf16 %v429, 0
      %v460 = vmax.bf16 %v430, 0
      %v461 = vstv %s313
      %v462 = vadd.s32 %v461, 1
      %v463 = vadd.s32 %v461, 2
      %v464 = vadd.s32 %v461, 3
      %v465 = vadd.s32 %v461, 4
      %v466 = vadd.s32 %v461, 5
      %v467 = vadd.s32 %v461, 6
      %v468 = vadd.s32 %v461, 7
      %v469 = vadd.s32 %v461, 8
      %v470 = vadd.s32 %v461, 9
      %v471 = vlaneseq
      %v472 = vshrl.u32 %v471, 7
      %v473 = vadd.s32 %v472, 8
      %v474 = vadd.s32 %v472, 16
      %vm475 = vcmp.ge.s32.totalorder %v461, 1
      %vm476 = vcmp.ge.s32.totalorder %v462, 1
      %vm477 = vcmp.ge.s32.totalorder %v463, 1
      %vm478 = vcmp.ge.s32.totalorder %v464, 1
      %vm479 = vcmp.ge.s32.totalorder %v465, 1
      %vm480 = vcmp.ge.s32.totalorder %v466, 1
      %vm481 = vcmp.ge.s32.totalorder %v467, 1
      %vm482 = vcmp.ge.s32.totalorder %v468, 1
      %vm483 = vcmp.ge.s32.totalorder %v469, 1
      %vm484 = vcmp.ge.s32.totalorder %v470, 1
      %vm485 = vcmp.lt.s32.totalorder %v461, 17
      %vm486 = vcmp.lt.s32.totalorder %v462, 17
      %vm487 = vcmp.lt.s32.totalorder %v463, 17
      %vm488 = vcmp.lt.s32.totalorder %v464, 17
      %vm489 = vcmp.lt.s32.totalorder %v465, 17
      %vm490 = vcmp.lt.s32.totalorder %v466, 17
      %vm491 = vcmp.lt.s32.totalorder %v467, 17
      %vm492 = vcmp.lt.s32.totalorder %v468, 17
      %vm493 = vcmp.lt.s32.totalorder %v469, 17
      %vm494 = vcmp.lt.s32.totalorder %v470, 17
      %vm495 = vmand %vm475, %vm485
      %vm496 = vmand %vm476, %vm486
      %vm497 = vmand %vm477, %vm487
      %vm498 = vmand %vm478, %vm488
      %vm499 = vmand %vm479, %vm489
      %vm500 = vmand %vm480, %vm490
      %vm501 = vmand %vm481, %vm491
      %vm502 = vmand %vm482, %vm492
      %vm503 = vmand %vm483, %vm493
      %vm504 = vmand %vm484, %vm494
      %vm505 = vcmp.ge.s32.totalorder %v472, 1
      %vm506 = vcmp.ge.s32.totalorder %v473, 1
      %vm507 = vcmp.ge.s32.totalorder %v474, 1
      %vm508 = vmand %vm495, %vm505
      %vm509 = vmand %vm495, %vm506
      %vm510 = vmand %vm495, %vm507
      %vm511 = vmand %vm496, %vm505
      %vm512 = vmand %vm496, %vm506
      %vm513 = vmand %vm496, %vm507
      %vm514 = vmand %vm497, %vm505
      %vm515 = vmand %vm497, %vm506
      %vm516 = vmand %vm497, %vm507
      %vm517 = vmand %vm498, %vm505
      %vm518 = vmand %vm498, %vm506
      %vm519 = vmand %vm498, %vm507
      %vm520 = vmand %vm499, %vm505
      %vm521 = vmand %vm499, %vm506
      %vm522 = vmand %vm499, %vm507
      %vm523 = vmand %vm500, %vm505
      %vm524 = vmand %vm500, %vm506
      %vm525 = vmand %vm500, %vm507
      %vm526 = vmand %vm501, %vm505
      %vm527 = vmand %vm501, %vm506
      %vm528 = vmand %vm501, %vm507
      %vm529 = vmand %vm502, %vm505
      %vm530 = vmand %vm502, %vm506
      %vm531 = vmand %vm502, %vm507
      %vm532 = vmand %vm503, %vm505
      %vm533 = vmand %vm503, %vm506
      %vm534 = vmand %vm503, %vm507
      %vm535 = vmand %vm504, %vm505
      %vm536 = vmand %vm504, %vm506
      %vm537 = vmand %vm504, %vm507
      %vm538 = vcmp.lt.s32.totalorder %v472, 17
      %vm539 = vcmp.lt.s32.totalorder %v473, 17
      %vm540 = vcmp.lt.s32.totalorder %v474, 17
      %vm541 = vmand %vm508, %vm538
      %vm542 = vmand %vm509, %vm539
      %vm543 = vmand %vm510, %vm540
      %vm544 = vmand %vm511, %vm538
      %vm545 = vmand %vm512, %vm539
      %vm546 = vmand %vm513, %vm540
      %vm547 = vmand %vm514, %vm538
      %vm548 = vmand %vm515, %vm539
      %vm549 = vmand %vm516, %vm540
      %vm550 = vmand %vm517, %vm538
      %vm551 = vmand %vm518, %vm539
      %vm552 = vmand %vm519, %vm540
      %vm553 = vmand %vm520, %vm538
      %vm554 = vmand %vm521, %vm539
      %vm555 = vmand %vm522, %vm540
      %vm556 = vmand %vm523, %vm538
      %vm557 = vmand %vm524, %vm539
      %vm558 = vmand %vm525, %vm540
      %vm559 = vmand %vm526, %vm538
      %vm560 = vmand %vm527, %vm539
      %vm561 = vmand %vm528, %vm540
      %vm562 = vmand %vm529, %vm538
      %vm563 = vmand %vm530, %vm539
      %vm564 = vmand %vm531, %vm540
      %vm565 = vmand %vm532, %vm538
      %vm566 = vmand %vm533, %vm539
      %vm567 = vmand %vm534, %vm540
      %vm568 = vmand %vm535, %vm538
      %vm569 = vmand %vm536, %vm539
      %vm570 = vmand %vm537, %vm540
      %vm571 = vmpackc.low %vm541, %vm541
      %vm572 = vmpackc.low %vm542, %vm542
      %vm573 = vmpackc.low %vm543, %vm543
      %vm574 = vmpackc.low %vm544, %vm544
      %vm575 = vmpackc.low %vm545, %vm545
      %vm576 = vmpackc.low %vm546, %vm546
      %vm577 = vmpackc.low %vm547, %vm547
      %vm578 = vmpackc.low %vm548, %vm548
      %vm579 = vmpackc.low %vm549, %vm549
      %vm580 = vmpackc.low %vm550, %vm550
      %vm581 = vmpackc.low %vm551, %vm551
      %vm582 = vmpackc.low %vm552, %vm552
      %vm583 = vmpackc.low %vm553, %vm553
      %vm584 = vmpackc.low %vm554, %vm554
      %vm585 = vmpackc.low %vm555, %vm555
      %vm586 = vmpackc.low %vm556, %vm556
      %vm587 = vmpackc.low %vm557, %vm557
      %vm588 = vmpackc.low %vm558, %vm558
      %vm589 = vmpackc.low %vm559, %vm559
      %vm590 = vmpackc.low %vm560, %vm560
      %vm591 = vmpackc.low %vm561, %vm561
      %vm592 = vmpackc.low %vm562, %vm562
      %vm593 = vmpackc.low %vm563, %vm563
      %vm594 = vmpackc.low %vm564, %vm564
      %vm595 = vmpackc.low %vm565, %vm565
      %vm596 = vmpackc.low %vm566, %vm566
      %vm597 = vmpackc.low %vm567, %vm567
      %vm598 = vmpackc.low %vm568, %vm568
      %vm599 = vmpackc.low %vm569, %vm569
      %vm600 = vmpackc.low %vm570, %vm570
      %v601 = vsel %vm571, %v431, 0
      %v602 = vsel %vm572, %v432, 0
      %v603 = vsel %vm573, %v433, 0
      %v604 = vsel %vm574, %v434, 0
      %v605 = vsel %vm575, %v435, 0
      %v606 = vsel %vm576, %v436, 0
      %v607 = vsel %vm577, %v437, 0
      %v608 = vsel %vm578, %v438, 0
      %v609 = vsel %vm579, %v439, 0
      %v610 = vsel %vm580, %v440, 0
      %v611 = vsel %vm581, %v441, 0
      %v612 = vsel %vm582, %v442, 0
      %v613 = vsel %vm583, %v443, 0
      %v614 = vsel %vm584, %v444, 0
      %v615 = vsel %vm585, %v445, 0
      %v616 = vsel %vm586, %v446, 0
      %v617 = vsel %vm587, %v447, 0
      %v618 = vsel %vm588, %v448, 0
      %v619 = vsel %vm589, %v449, 0
      %v620 = vsel %vm590, %v450, 0
      %v621 = vsel %vm591, %v451, 0
      %v622 = vsel %vm592, %v452, 0
      %v623 = vsel %vm593, %v453, 0
      %v624 = vsel %vm594, %v454, 0
      %v625 = vsel %vm595, %v455, 0
      %v626 = vsel %vm596, %v456, 0
      %v627 = vsel %vm597, %v457, 0
      %v628 = vsel %vm598, %v458, 0
      %v629 = vsel %vm599, %v459, 0
      %v630 = vsel %vm600, %v460, 0
      %vm631 = vsmask.f32 3328
      %vm632 = vsmask.f32 7440
      %vm633 = vmor %vm631, %vm632
      %v635 = vshrl.u32 %v601, 16
      %v637 = vrot.slane %v635, 4
      %v638 = vshll.u32 %v601, 16
      %v640 = vrot.slane %v638, 5
      %v641 = vor.u32 %v637, %v640
      %v642 = vrot.slane %v641, 4
      %v644 = vshll.u32 %v602, 16
      %v646 = vrot.slane %v644, 5
      %v647 = vsel %vm633, %v642, %v646
      %v648 = vshrl.u32 %v602, 16
      %v650 = vrot.slane %v648, 4
      %v651 = vor.u32 %v650, %v646
      %v652 = vrot.slane %v651, 4
      %v654 = vshll.u32 %v603, 16
      %v656 = vrot.slane %v654, 5
      %v657 = vsel %vm633, %v652, %v656
      %v659 = vshrl.u32 %v604, 16
      %v661 = vrot.slane %v659, 4
      %v662 = vshll.u32 %v604, 16
      %v664 = vrot.slane %v662, 5
      %v665 = vor.u32 %v661, %v664
      %v666 = vrot.slane %v665, 4
      %v668 = vshll.u32 %v605, 16
      %v670 = vrot.slane %v668, 5
      %v671 = vsel %vm633, %v666, %v670
      %v672 = vshrl.u32 %v605, 16
      %v674 = vrot.slane %v672, 4
      %v675 = vor.u32 %v674, %v670
      %v676 = vrot.slane %v675, 4
      %v678 = vshll.u32 %v606, 16
      %v680 = vrot.slane %v678, 5
      %v681 = vsel %vm633, %v676, %v680
      %v683 = vshrl.u32 %v607, 16
      %v685 = vrot.slane %v683, 4
      %v686 = vshll.u32 %v607, 16
      %v688 = vrot.slane %v686, 5
      %v689 = vor.u32 %v685, %v688
      %v690 = vrot.slane %v689, 4
      %v692 = vshll.u32 %v608, 16
      %v694 = vrot.slane %v692, 5
      %v695 = vsel %vm633, %v690, %v694
      %v696 = vshrl.u32 %v608, 16
      %v698 = vrot.slane %v696, 4
      %v699 = vor.u32 %v698, %v694
      %v700 = vrot.slane %v699, 4
      %v702 = vshll.u32 %v609, 16
      %v704 = vrot.slane %v702, 5
      %v705 = vsel %vm633, %v700, %v704
      %v707 = vshrl.u32 %v610, 16
      %v709 = vrot.slane %v707, 4
      %v710 = vshll.u32 %v610, 16
      %v712 = vrot.slane %v710, 5
      %v713 = vor.u32 %v709, %v712
      %v714 = vrot.slane %v713, 4
      %v716 = vshll.u32 %v611, 16
      %v718 = vrot.slane %v716, 5
      %v719 = vsel %vm633, %v714, %v718
      %v720 = vshrl.u32 %v611, 16
      %v722 = vrot.slane %v720, 4
      %v723 = vor.u32 %v722, %v718
      %v724 = vrot.slane %v723, 4
      %v726 = vshll.u32 %v612, 16
      %v728 = vrot.slane %v726, 5
      %v729 = vsel %vm633, %v724, %v728
      %v731 = vshrl.u32 %v613, 16
      %v733 = vrot.slane %v731, 4
      %v734 = vshll.u32 %v613, 16
      %v736 = vrot.slane %v734, 5
      %v737 = vor.u32 %v733, %v736
      %v738 = vrot.slane %v737, 4
      %v740 = vshll.u32 %v614, 16
      %v742 = vrot.slane %v740, 5
      %v743 = vsel %vm633, %v738, %v742
      %v744 = vshrl.u32 %v614, 16
      %v746 = vrot.slane %v744, 4
      %v747 = vor.u32 %v746, %v742
      %v748 = vrot.slane %v747, 4
      %v750 = vshll.u32 %v615, 16
      %v752 = vrot.slane %v750, 5
      %v753 = vsel %vm633, %v748, %v752
      %v755 = vshrl.u32 %v616, 16
      %v757 = vrot.slane %v755, 4
      %v758 = vshll.u32 %v616, 16
      %v760 = vrot.slane %v758, 5
      %v761 = vor.u32 %v757, %v760
      %v762 = vrot.slane %v761, 4
      %v764 = vshll.u32 %v617, 16
      %v766 = vrot.slane %v764, 5
      %v767 = vsel %vm633, %v762, %v766
      %v768 = vshrl.u32 %v617, 16
      %v770 = vrot.slane %v768, 4
      %v771 = vor.u32 %v770, %v766
      %v772 = vrot.slane %v771, 4
      %v774 = vshll.u32 %v618, 16
      %v776 = vrot.slane %v774, 5
      %v777 = vsel %vm633, %v772, %v776
      %v779 = vshrl.u32 %v619, 16
      %v781 = vrot.slane %v779, 4
      %v782 = vshll.u32 %v619, 16
      %v784 = vrot.slane %v782, 5
      %v785 = vor.u32 %v781, %v784
      %v786 = vrot.slane %v785, 4
      %v788 = vshll.u32 %v620, 16
      %v790 = vrot.slane %v788, 5
      %v791 = vsel %vm633, %v786, %v790
      %v792 = vshrl.u32 %v620, 16
      %v794 = vrot.slane %v792, 4
      %v795 = vor.u32 %v794, %v790
      %v796 = vrot.slane %v795, 4
      %v798 = vshll.u32 %v621, 16
      %v800 = vrot.slane %v798, 5
      %v801 = vsel %vm633, %v796, %v800
      %v803 = vshrl.u32 %v622, 16
      %v805 = vrot.slane %v803, 4
      %v806 = vshll.u32 %v622, 16
      %v808 = vrot.slane %v806, 5
      %v809 = vor.u32 %v805, %v808
      %v810 = vrot.slane %v809, 4
      %v812 = vshll.u32 %v623, 16
      %v814 = vrot.slane %v812, 5
      %v815 = vsel %vm633, %v810, %v814
      %v816 = vshrl.u32 %v623, 16
      %v818 = vrot.slane %v816, 4
      %v819 = vor.u32 %v818, %v814
      %v820 = vrot.slane %v819, 4
      %v822 = vshll.u32 %v624, 16
      %v824 = vrot.slane %v822, 5
      %v825 = vsel %vm633, %v820, %v824
      %vm850 = vcmask 1042432
      %vm851 = vcmask 1046532
      %vm852 = vmor %vm850, %vm851
      %v853 = vrot.slane %v601, 5
      %v854 = vrot.slane %v853, 4
      %v855 = vrot.slane %v602, 5
      %v856 = vsel %vm852, %v854, %v855
      %v857 = vrot.slane %v855, 4
      %v858 = vrot.slane %v603, 5
      %v859 = vsel %vm852, %v857, %v858
      %v860 = vrot.slane %v604, 5
      %v861 = vrot.slane %v860, 4
      %v862 = vrot.slane %v605, 5
      %v863 = vsel %vm852, %v861, %v862
      %v864 = vrot.slane %v862, 4
      %v865 = vrot.slane %v606, 5
      %v866 = vsel %vm852, %v864, %v865
      %v867 = vrot.slane %v607, 5
      %v868 = vrot.slane %v867, 4
      %v869 = vrot.slane %v608, 5
      %v870 = vsel %vm852, %v868, %v869
      %v871 = vrot.slane %v869, 4
      %v872 = vrot.slane %v609, 5
      %v873 = vsel %vm852, %v871, %v872
      %v874 = vrot.slane %v610, 5
      %v875 = vrot.slane %v874, 4
      %v876 = vrot.slane %v611, 5
      %v877 = vsel %vm852, %v875, %v876
      %v878 = vrot.slane %v876, 4
      %v879 = vrot.slane %v612, 5
      %v880 = vsel %vm852, %v878, %v879
      %v881 = vrot.slane %v613, 5
      %v882 = vrot.slane %v881, 4
      %v883 = vrot.slane %v614, 5
      %v884 = vsel %vm852, %v882, %v883
      %v885 = vrot.slane %v883, 4
      %v886 = vrot.slane %v615, 5
      %v887 = vsel %vm852, %v885, %v886
      %v888 = vrot.slane %v616, 5
      %v889 = vrot.slane %v888, 4
      %v890 = vrot.slane %v617, 5
      %v891 = vsel %vm852, %v889, %v890
      %v892 = vrot.slane %v890, 4
      %v893 = vrot.slane %v618, 5
      %v894 = vsel %vm852, %v892, %v893
      %v895 = vrot.slane %v619, 5
      %v896 = vrot.slane %v895, 4
      %v897 = vrot.slane %v620, 5
      %v898 = vsel %vm852, %v896, %v897
      %v899 = vrot.slane %v897, 4
      %v900 = vrot.slane %v621, 5
      %v901 = vsel %vm852, %v899, %v900
      %v902 = vrot.slane %v622, 5
      %v903 = vrot.slane %v902, 4
      %v904 = vrot.slane %v623, 5
      %v905 = vsel %vm852, %v903, %v904
      %v906 = vrot.slane %v904, 4
      %v907 = vrot.slane %v624, 5
      %v908 = vsel %vm852, %v906, %v907
      %v910 = vshrl.u32 %v625, 16
      %v912 = vrot.slane %v910, 4
      %v913 = vshll.u32 %v625, 16
      %v915 = vrot.slane %v913, 5
      %v916 = vor.u32 %v912, %v915
      %v917 = vrot.slane %v916, 4
      %v919 = vshll.u32 %v626, 16
      %v921 = vrot.slane %v919, 5
      %v922 = vsel %vm633, %v917, %v921
      %v923 = vshrl.u32 %v626, 16
      %v925 = vrot.slane %v923, 4
      %v926 = vor.u32 %v925, %v921
      %v927 = vrot.slane %v926, 4
      %v929 = vshll.u32 %v627, 16
      %v931 = vrot.slane %v929, 5
      %v932 = vsel %vm633, %v927, %v931
      %v936 = vrot.slane %v625, 5
      %v937 = vrot.slane %v936, 4
      %v938 = vrot.slane %v626, 5
      %v939 = vsel %vm852, %v937, %v938
      %v940 = vrot.slane %v938, 4
      %v941 = vrot.slane %v627, 5
      %v942 = vsel %vm852, %v940, %v941
      %v944 = vshrl.u32 %v628, 16
      %v946 = vrot.slane %v944, 4
      %v947 = vshll.u32 %v628, 16
      %v949 = vrot.slane %v947, 5
      %v950 = vor.u32 %v946, %v949
      %v951 = vrot.slane %v950, 4
      %v953 = vshll.u32 %v629, 16
      %v955 = vrot.slane %v953, 5
      %v956 = vsel %vm633, %v951, %v955
      %v957 = vshrl.u32 %v629, 16
      %v959 = vrot.slane %v957, 4
      %v960 = vor.u32 %v959, %v955
      %v961 = vrot.slane %v960, 4
      %v963 = vshll.u32 %v630, 16
      %v965 = vrot.slane %v963, 5
      %v966 = vsel %vm633, %v961, %v965
      %v970 = vrot.slane %v628, 5
      %v971 = vrot.slane %v970, 4
      %v972 = vrot.slane %v629, 5
      %v973 = vsel %vm852, %v971, %v972
      %v974 = vrot.slane %v972, 4
      %v975 = vrot.slane %v630, 5
      %v976 = vsel %vm852, %v974, %v975
      %v977 = vunpack.c.l.b16 %v601
      %v978 = vunpack.c.l.b16 %v602
      %v979 = vunpack.c.l.b16 %v604
      %v980 = vunpack.c.l.b16 %v605
      %v981 = vunpack.c.l.b16 %v607
      %v982 = vunpack.c.l.b16 %v608
      %v983 = vunpack.c.l.b16 %v610
      %v984 = vunpack.c.l.b16 %v611
      %v985 = vunpack.c.l.b16 %v613
      %v986 = vunpack.c.l.b16 %v614
      %v987 = vunpack.c.l.b16 %v616
      %v988 = vunpack.c.l.b16 %v617
      %v989 = vunpack.c.l.b16 %v619
      %v990 = vunpack.c.l.b16 %v620
      %v991 = vunpack.c.l.b16 %v622
      %v992 = vunpack.c.l.b16 %v623
      %v993 = vpack.c.b16 %v978, %v977
      %v994 = vpack.c.b16 %v980, %v979
      %v995 = vpack.c.b16 %v982, %v981
      %v996 = vpack.c.b16 %v984, %v983
      %v997 = vpack.c.b16 %v986, %v985
      %v998 = vpack.c.b16 %v988, %v987
      %v999 = vpack.c.b16 %v990, %v989
      %v1000 = vpack.c.b16 %v992, %v991
      %v1009 = vunpack.c.l.b16 %v647
      %v1010 = vunpack.c.l.b16 %v657
      %v1011 = vunpack.c.l.b16 %v671
      %v1012 = vunpack.c.l.b16 %v681
      %v1013 = vunpack.c.l.b16 %v695
      %v1014 = vunpack.c.l.b16 %v705
      %v1015 = vunpack.c.l.b16 %v719
      %v1016 = vunpack.c.l.b16 %v729
      %v1017 = vunpack.c.l.b16 %v743
      %v1018 = vunpack.c.l.b16 %v753
      %v1019 = vunpack.c.l.b16 %v767
      %v1020 = vunpack.c.l.b16 %v777
      %v1021 = vunpack.c.l.b16 %v791
      %v1022 = vunpack.c.l.b16 %v801
      %v1023 = vunpack.c.l.b16 %v815
      %v1024 = vunpack.c.l.b16 %v825
      %v1025 = vpack.c.b16 %v1010, %v1009
      %v1026 = vpack.c.b16 %v1012, %v1011
      %v1027 = vpack.c.b16 %v1014, %v1013
      %v1028 = vpack.c.b16 %v1016, %v1015
      %v1029 = vpack.c.b16 %v1018, %v1017
      %v1030 = vpack.c.b16 %v1020, %v1019
      %v1031 = vpack.c.b16 %v1022, %v1021
      %v1032 = vpack.c.b16 %v1024, %v1023
      %v1041 = vunpack.c.l.b16 %v856
      %v1042 = vunpack.c.l.b16 %v859
      %v1043 = vunpack.c.l.b16 %v863
      %v1044 = vunpack.c.l.b16 %v866
      %v1045 = vunpack.c.l.b16 %v870
      %v1046 = vunpack.c.l.b16 %v873
      %v1047 = vunpack.c.l.b16 %v877
      %v1048 = vunpack.c.l.b16 %v880
      %v1049 = vunpack.c.l.b16 %v884
      %v1050 = vunpack.c.l.b16 %v887
      %v1051 = vunpack.c.l.b16 %v891
      %v1052 = vunpack.c.l.b16 %v894
      %v1053 = vunpack.c.l.b16 %v898
      %v1054 = vunpack.c.l.b16 %v901
      %v1055 = vunpack.c.l.b16 %v905
      %v1056 = vunpack.c.l.b16 %v908
      %v1057 = vpack.c.b16 %v1042, %v1041
      %v1058 = vpack.c.b16 %v1044, %v1043
      %v1059 = vpack.c.b16 %v1046, %v1045
      %v1060 = vpack.c.b16 %v1048, %v1047
      %v1061 = vpack.c.b16 %v1050, %v1049
      %v1062 = vpack.c.b16 %v1052, %v1051
      %v1063 = vpack.c.b16 %v1054, %v1053
      %v1064 = vpack.c.b16 %v1056, %v1055
      %v1073 = vunpack.c.l.b16 %v625
      %v1074 = vunpack.c.l.b16 %v626
      %v1075 = vpack.c.b16 %v1074, %v1073
      %v1077 = vunpack.c.l.b16 %v922
      %v1078 = vunpack.c.l.b16 %v932
      %v1079 = vpack.c.b16 %v1078, %v1077
      %v1081 = vunpack.c.l.b16 %v939
      %v1082 = vunpack.c.l.b16 %v942
      %v1083 = vpack.c.b16 %v1082, %v1081
      %v1085 = vunpack.c.l.b16 %v628
      %v1086 = vunpack.c.l.b16 %v629
      %v1087 = vpack.c.b16 %v1086, %v1085
      %v1089 = vunpack.c.l.b16 %v956
      %v1090 = vunpack.c.l.b16 %v966
      %v1091 = vpack.c.b16 %v1090, %v1089
      %v1093 = vunpack.c.l.b16 %v973
      %v1094 = vunpack.c.l.b16 %v976
      %v1095 = vpack.c.b16 %v1094, %v1093
      %v1097 = vld [vmem:[%s3] sm:$0xf]
      %v1098 = vld [vmem:[%s3 + $0x4] sm:$0xf]
      %v1099 = vld [vmem:[%s3 + $0x8] sm:$0xf]
      %v1100 = vld [vmem:[%s3 + $0xc] sm:$0xf]
      %v1101 = vld [vmem:[%s3 + $0x10] sm:$0xf]
      %v1102 = vld [vmem:[%s3 + $0x14] sm:$0xf]
      %v1103 = vld [vmem:[%s3 + $0x18] sm:$0xf]
      %v1104 = vld [vmem:[%s3 + $0x1c] sm:$0xf]
      %v1105 = vld [vmem:[%s3 + $0x20] sm:$0xf]
      %v1106 = vld [vmem:[%s3 + $0x24] sm:$0xf]
      %v1107 = vld [vmem:[%s3 + $0x28] sm:$0xf]
      %v1108 = vld [vmem:[%s3 + $0x2c] sm:$0xf]
      %v1109 = vld [vmem:[%s3 + $0x30] sm:$0xf]
      %v1110 = vld [vmem:[%s3 + $0x34] sm:$0xf]
      %v1111 = vld [vmem:[%s3 + $0x38] sm:$0xf]
      %v1112 = vld [vmem:[%s3 + $0x3c] sm:$0xf]
      %v1113 = vld [vmem:[%s3 + $0x40] sm:$0xf]
      %v1114 = vld [vmem:[%s3 + $0x44] sm:$0xf]
      %v1115 = vld [vmem:[%s3 + $0x48] sm:$0xf]
      %v1116 = vld [vmem:[%s3 + $0x4c] sm:$0xf]
      %v1117 = vld [vmem:[%s3 + $0x50] sm:$0xf]
      %v1118 = vld [vmem:[%s3 + $0x54] sm:$0xf]
      %v1119 = vld [vmem:[%s3 + $0x58] sm:$0xf]
      %v1120 = vld [vmem:[%s3 + $0x5c] sm:$0xf]
      %v1121 = vld [vmem:[%s3 + $0x60] sm:$0xf]
      %v1122 = vld [vmem:[%s3 + $0x64] sm:$0xf]
      %v1123 = vld [vmem:[%s3 + $0x68] sm:$0xf]
      %v1124 = vld [vmem:[%s3 + $0x6c] sm:$0xf]
      %v1125 = vld [vmem:[%s3 + $0x70] sm:$0xf]
      %v1126 = vld [vmem:[%s3 + $0x74] sm:$0xf]
      %v1127 = vld [vmem:[%s3 + $0x78] sm:$0xf]
      %v1128 = vld [vmem:[%s3 + $0x7c] sm:$0xf]
      %v1129 = vld [vmem:[%s3 + $0x80] sm:$0xf]
      %v1130 = vld [vmem:[%s3 + $0x84] sm:$0xf]
      %v1131 = vld [vmem:[%s3 + $0x88] sm:$0xf]
      %v1132 = vld [vmem:[%s3 + $0x8c] sm:$0xf]
      %v1133 = vld [vmem:[%s3 + $0x90] sm:$0xf]
      %v1134 = vld [vmem:[%s3 + $0x94] sm:$0xf]
      %v1135 = vld [vmem:[%s3 + $0x98] sm:$0xf]
      %v1136 = vld [vmem:[%s3 + $0x9c] sm:$0xf]
      %v1137 = vld [vmem:[%s3 + $0xa0] sm:$0xf]
      %v1138 = vld [vmem:[%s3 + $0xa4] sm:$0xf]
      %v1139 = vld [vmem:[%s3 + $0xa8] sm:$0xf]
      %v1140 = vld [vmem:[%s3 + $0xac] sm:$0xf]
      %v1141 = vld [vmem:[%s3 + $0xb0] sm:$0xf]
      %v1142 = vld [vmem:[%s3 + $0xb4] sm:$0xf]
      %v1143 = vld [vmem:[%s3 + $0xb8] sm:$0xf]
      %v1144 = vld [vmem:[%s3 + $0xbc] sm:$0xf]
      %v1145 = vld [vmem:[%s3 + $0xc0] sm:$0xf]
      %v1146 = vld [vmem:[%s3 + $0xc4] sm:$0xf]
      %v1147 = vld [vmem:[%s3 + $0xc8] sm:$0xf]
      %v1148 = vld [vmem:[%s3 + $0xcc] sm:$0xf]
      %v1149 = vld [vmem:[%s3 + $0xd0] sm:$0xf]
      %v1150 = vld [vmem:[%s3 + $0xd4] sm:$0xf]
      %v1151 = vld [vmem:[%s3 + $0xd8] sm:$0xf]
      %v1152 = vld [vmem:[%s3 + $0xdc] sm:$0xf]
      %v1153 = vld [vmem:[%s3 + $0xe0] sm:$0xf]
      %v1154 = vld [vmem:[%s3 + $0xe4] sm:$0xf]
      %v1155 = vld [vmem:[%s3 + $0xe8] sm:$0xf]
      %v1156 = vld [vmem:[%s3 + $0xec] sm:$0xf]
      %v1157 = vld [vmem:[%s3 + $0xf0] sm:$0xf]
      %v1158 = vld [vmem:[%s3 + $0xf4] sm:$0xf]
      %v1159 = vld [vmem:[%s3 + $0xf8] sm:$0xf]
      %v1160 = vld [vmem:[%s3 + $0xfc] sm:$0xf]
      %v1161 = vld [vmem:[%s3 + $0x100] sm:$0xf]
      %v1162 = vld [vmem:[%s3 + $0x104] sm:$0xf]
      %v1163 = vld [vmem:[%s3 + $0x108] sm:$0xf]
      %v1164 = vld [vmem:[%s3 + $0x10c] sm:$0xf]
      %v1165 = vld [vmem:[%s3 + $0x110] sm:$0xf]
      %v1166 = vld [vmem:[%s3 + $0x114] sm:$0xf]
      %v1167 = vld [vmem:[%s3 + $0x118] sm:$0xf]
      %v1168 = vld [vmem:[%s3 + $0x11c] sm:$0xf]
      %v1169 = vld [vmem:[%s3 + $0x120] sm:$0xf]
      %v1170 = vld [vmem:[%s3 + $0x124] sm:$0xf]
      %v1171 = vld [vmem:[%s3 + $0x128] sm:$0xf]
      %v1172 = vld [vmem:[%s3 + $0x12c] sm:$0xf]
      %v1173 = vld [vmem:[%s3 + $0x130] sm:$0xf]
      %v1174 = vld [vmem:[%s3 + $0x134] sm:$0xf]
      %v1175 = vld [vmem:[%s3 + $0x138] sm:$0xf]
      %v1176 = vld [vmem:[%s3 + $0x13c] sm:$0xf]
      %v1177 = vld [vmem:[%s3 + $0x140] sm:$0xf]
      %v1178 = vld [vmem:[%s3 + $0x144] sm:$0xf]
      %v1179 = vld [vmem:[%s3 + $0x148] sm:$0xf]
      %v1180 = vld [vmem:[%s3 + $0x14c] sm:$0xf]
      %v1181 = vld [vmem:[%s3 + $0x150] sm:$0xf]
      %v1182 = vld [vmem:[%s3 + $0x154] sm:$0xf]
      %v1183 = vld [vmem:[%s3 + $0x158] sm:$0xf]
      %v1184 = vld [vmem:[%s3 + $0x15c] sm:$0xf]
      %v1185 = vld [vmem:[%s3 + $0x160] sm:$0xf]
      %v1186 = vld [vmem:[%s3 + $0x164] sm:$0xf]
      %v1187 = vld [vmem:[%s3 + $0x168] sm:$0xf]
      %v1188 = vld [vmem:[%s3 + $0x16c] sm:$0xf]
      %v1189 = vld [vmem:[%s3 + $0x170] sm:$0xf]
      %v1190 = vld [vmem:[%s3 + $0x174] sm:$0xf]
      %v1191 = vld [vmem:[%s3 + $0x178] sm:$0xf]
      %v1192 = vld [vmem:[%s3 + $0x17c] sm:$0xf]
      %v1193 = vld [vmem:[%s3 + $0x180] sm:$0xf]
      %v1194 = vld [vmem:[%s3 + $0x184] sm:$0xf]
      %v1195 = vld [vmem:[%s3 + $0x188] sm:$0xf]
      %v1196 = vld [vmem:[%s3 + $0x18c] sm:$0xf]
      %v1197 = vld [vmem:[%s3 + $0x190] sm:$0xf]
      %v1198 = vld [vmem:[%s3 + $0x194] sm:$0xf]
      %v1199 = vld [vmem:[%s3 + $0x198] sm:$0xf]
      %v1200 = vld [vmem:[%s3 + $0x19c] sm:$0xf]
      %v1201 = vld [vmem:[%s3 + $0x1a0] sm:$0xf]
      %v1202 = vld [vmem:[%s3 + $0x1a4] sm:$0xf]
      %v1203 = vld [vmem:[%s3 + $0x1a8] sm:$0xf]
      %v1204 = vld [vmem:[%s3 + $0x1ac] sm:$0xf]
      %v1205 = vld [vmem:[%s3 + $0x1b0] sm:$0xf]
      %v1206 = vld [vmem:[%s3 + $0x1b4] sm:$0xf]
      %v1207 = vld [vmem:[%s3 + $0x1b8] sm:$0xf]
      %v1208 = vld [vmem:[%s3 + $0x1bc] sm:$0xf]
      %v1209 = vld [vmem:[%s3 + $0x1c0] sm:$0xf]
      %v1210 = vld [vmem:[%s3 + $0x1c4] sm:$0xf]
      %v1211 = vld [vmem:[%s3 + $0x1c8] sm:$0xf]
      %v1212 = vld [vmem:[%s3 + $0x1cc] sm:$0xf]
      %v1213 = vld [vmem:[%s3 + $0x1d0] sm:$0xf]
      %v1214 = vld [vmem:[%s3 + $0x1d4] sm:$0xf]
      %v1215 = vld [vmem:[%s3 + $0x1d8] sm:$0xf]
      %v1216 = vld [vmem:[%s3 + $0x1dc] sm:$0xf]
      %v1217 = vld [vmem:[%s3 + $0x1e0] sm:$0xf]
      %v1218 = vld [vmem:[%s3 + $0x1e4] sm:$0xf]
      %v1219 = vld [vmem:[%s3 + $0x1e8] sm:$0xf]
      %v1220 = vld [vmem:[%s3 + $0x1ec] sm:$0xf]
      %v1221 = vld [vmem:[%s3 + $0x1f0] sm:$0xf]
      %v1222 = vld [vmem:[%s3 + $0x1f4] sm:$0xf]
      %v1223 = vld [vmem:[%s3 + $0x1f8] sm:$0xf]
      %v1224 = vld [vmem:[%s3 + $0x1fc] sm:$0xf]
      %v1225 = vld [vmem:[%s3 + $0x200] sm:$0xf]
      %v1226 = vld [vmem:[%s3 + $0x204] sm:$0xf]
      %v1227 = vld [vmem:[%s3 + $0x208] sm:$0xf]
      %v1228 = vld [vmem:[%s3 + $0x20c] sm:$0xf]
      %v1229 = vld [vmem:[%s3 + $0x210] sm:$0xf]
      %v1230 = vld [vmem:[%s3 + $0x214] sm:$0xf]
      %v1231 = vld [vmem:[%s3 + $0x218] sm:$0xf]
      %v1232 = vld [vmem:[%s3 + $0x21c] sm:$0xf]
      %v1233 = vld [vmem:[%s3 + $0x220] sm:$0xf]
      %v1234 = vld [vmem:[%s3 + $0x224] sm:$0xf]
      %v1235 = vld [vmem:[%s3 + $0x228] sm:$0xf]
      %v1236 = vld [vmem:[%s3 + $0x22c] sm:$0xf]
      %v1237 = vld [vmem:[%s3 + $0x230] sm:$0xf]
      %v1238 = vld [vmem:[%s3 + $0x234] sm:$0xf]
      %v1239 = vld [vmem:[%s3 + $0x238] sm:$0xf]
      %v1240 = vld [vmem:[%s3 + $0x23c] sm:$0xf]
      %v1385 = vunpack.c.l.b16 %v1097
      %v1386 = vunpack.c.l.b16 %v1098
      %v1387 = vunpack.c.l.b16 %v1099
      %v1388 = vunpack.c.l.b16 %v1100
      %v1389 = vunpack.c.l.b16 %v1101
      %v1390 = vunpack.c.l.b16 %v1102
      %v1391 = vunpack.c.l.b16 %v1103
      %v1392 = vunpack.c.l.b16 %v1104
      %v1393 = vunpack.c.l.b16 %v1105
      %v1394 = vunpack.c.l.b16 %v1106
      %v1395 = vunpack.c.l.b16 %v1107
      %v1396 = vunpack.c.l.b16 %v1108
      %v1397 = vunpack.c.l.b16 %v1109
      %v1398 = vunpack.c.l.b16 %v1110
      %v1399 = vunpack.c.l.b16 %v1111
      %v1400 = vunpack.c.l.b16 %v1112
      %v1401 = vunpack.c.l.b16 %v1113
      %v1402 = vunpack.c.l.b16 %v1114
      %v1403 = vunpack.c.l.b16 %v1115
      %v1404 = vunpack.c.l.b16 %v1116
      %v1405 = vunpack.c.l.b16 %v1117
      %v1406 = vunpack.c.l.b16 %v1118
      %v1407 = vunpack.c.l.b16 %v1119
      %v1408 = vunpack.c.l.b16 %v1120
      %v1409 = vunpack.c.l.b16 %v1121
      %v1410 = vunpack.c.l.b16 %v1122
      %v1411 = vunpack.c.l.b16 %v1123
      %v1412 = vunpack.c.l.b16 %v1124
      %v1413 = vunpack.c.l.b16 %v1125
      %v1414 = vunpack.c.l.b16 %v1126
      %v1415 = vunpack.c.l.b16 %v1127
      %v1416 = vunpack.c.l.b16 %v1128
      %v1417 = vunpack.c.l.b16 %v1129
      %v1418 = vunpack.c.l.b16 %v1130
      %v1419 = vunpack.c.l.b16 %v1131
      %v1420 = vunpack.c.l.b16 %v1132
      %v1421 = vunpack.c.l.b16 %v1133
      %v1422 = vunpack.c.l.b16 %v1134
      %v1423 = vunpack.c.l.b16 %v1135
      %v1424 = vunpack.c.l.b16 %v1136
      %v1425 = vunpack.c.l.b16 %v1137
      %v1426 = vunpack.c.l.b16 %v1138
      %v1427 = vunpack.c.l.b16 %v1139
      %v1428 = vunpack.c.l.b16 %v1140
      %v1429 = vunpack.c.l.b16 %v1141
      %v1430 = vunpack.c.l.b16 %v1142
      %v1431 = vunpack.c.l.b16 %v1143
      %v1432 = vunpack.c.l.b16 %v1144
      %v1433 = vunpack.c.l.b16 %v1145
      %v1434 = vunpack.c.l.b16 %v1146
      %v1435 = vunpack.c.l.b16 %v1147
      %v1436 = vunpack.c.l.b16 %v1148
      %v1437 = vunpack.c.l.b16 %v1149
      %v1438 = vunpack.c.l.b16 %v1150
      %v1439 = vunpack.c.l.b16 %v1151
      %v1440 = vunpack.c.l.b16 %v1152
      %v1441 = vunpack.c.l.b16 %v1153
      %v1442 = vunpack.c.l.b16 %v1154
      %v1443 = vunpack.c.l.b16 %v1155
      %v1444 = vunpack.c.l.b16 %v1156
      %v1445 = vunpack.c.l.b16 %v1157
      %v1446 = vunpack.c.l.b16 %v1158
      %v1447 = vunpack.c.l.b16 %v1159
      %v1448 = vunpack.c.l.b16 %v1160
      %v1449 = vunpack.c.l.b16 %v1161
      %v1450 = vunpack.c.l.b16 %v1162
      %v1451 = vunpack.c.l.b16 %v1163
      %v1452 = vunpack.c.l.b16 %v1164
      %v1453 = vunpack.c.l.b16 %v1165
      %v1454 = vunpack.c.l.b16 %v1166
      %v1455 = vunpack.c.l.b16 %v1167
      %v1456 = vunpack.c.l.b16 %v1168
      %v1457 = vunpack.c.l.b16 %v1169
      %v1458 = vunpack.c.l.b16 %v1170
      %v1459 = vunpack.c.l.b16 %v1171
      %v1460 = vunpack.c.l.b16 %v1172
      %v1461 = vunpack.c.l.b16 %v1173
      %v1462 = vunpack.c.l.b16 %v1174
      %v1463 = vunpack.c.l.b16 %v1175
      %v1464 = vunpack.c.l.b16 %v1176
      %v1465 = vunpack.c.l.b16 %v1177
      %v1466 = vunpack.c.l.b16 %v1178
      %v1467 = vunpack.c.l.b16 %v1179
      %v1468 = vunpack.c.l.b16 %v1180
      %v1469 = vunpack.c.l.b16 %v1181
      %v1470 = vunpack.c.l.b16 %v1182
      %v1471 = vunpack.c.l.b16 %v1183
      %v1472 = vunpack.c.l.b16 %v1184
      %v1473 = vunpack.c.l.b16 %v1185
      %v1474 = vunpack.c.l.b16 %v1186
      %v1475 = vunpack.c.l.b16 %v1187
      %v1476 = vunpack.c.l.b16 %v1188
      %v1477 = vunpack.c.l.b16 %v1189
      %v1478 = vunpack.c.l.b16 %v1190
      %v1479 = vunpack.c.l.b16 %v1191
      %v1480 = vunpack.c.l.b16 %v1192
      %v1481 = vunpack.c.l.b16 %v1193
      %v1482 = vunpack.c.l.b16 %v1194
      %v1483 = vunpack.c.l.b16 %v1195
      %v1484 = vunpack.c.l.b16 %v1196
      %v1485 = vunpack.c.l.b16 %v1197
      %v1486 = vunpack.c.l.b16 %v1198
      %v1487 = vunpack.c.l.b16 %v1199
      %v1488 = vunpack.c.l.b16 %v1200
      %v1489 = vunpack.c.l.b16 %v1201
      %v1490 = vunpack.c.l.b16 %v1202
      %v1491 = vunpack.c.l.b16 %v1203
      %v1492 = vunpack.c.l.b16 %v1204
      %v1493 = vunpack.c.l.b16 %v1205
      %v1494 = vunpack.c.l.b16 %v1206
      %v1495 = vunpack.c.l.b16 %v1207
      %v1496 = vunpack.c.l.b16 %v1208
      %v1497 = vunpack.c.l.b16 %v1209
      %v1498 = vunpack.c.l.b16 %v1210
      %v1499 = vunpack.c.l.b16 %v1211
      %v1500 = vunpack.c.l.b16 %v1212
      %v1501 = vunpack.c.l.b16 %v1213
      %v1502 = vunpack.c.l.b16 %v1214
      %v1503 = vunpack.c.l.b16 %v1215
      %v1504 = vunpack.c.l.b16 %v1216
      %v1505 = vunpack.c.l.b16 %v1217
      %v1506 = vunpack.c.l.b16 %v1218
      %v1507 = vunpack.c.l.b16 %v1219
      %v1508 = vunpack.c.l.b16 %v1220
      %v1509 = vunpack.c.l.b16 %v1221
      %v1510 = vunpack.c.l.b16 %v1222
      %v1511 = vunpack.c.l.b16 %v1223
      %v1512 = vunpack.c.l.b16 %v1224
      %v1513 = vunpack.c.l.b16 %v1225
      %v1514 = vunpack.c.l.b16 %v1226
      %v1515 = vunpack.c.l.b16 %v1227
      %v1516 = vunpack.c.l.b16 %v1228
      %v1517 = vunpack.c.l.b16 %v1229
      %v1518 = vunpack.c.l.b16 %v1230
      %v1519 = vunpack.c.l.b16 %v1231
      %v1520 = vunpack.c.l.b16 %v1232
      %v1521 = vunpack.c.l.b16 %v1233
      %v1522 = vunpack.c.l.b16 %v1234
      %v1523 = vunpack.c.l.b16 %v1235
      %v1524 = vunpack.c.l.b16 %v1236
      %v1525 = vunpack.c.l.b16 %v1237
      %v1526 = vunpack.c.l.b16 %v1238
      %v1527 = vunpack.c.l.b16 %v1239
      %v1528 = vunpack.c.l.b16 %v1240
      %v1529 = vpack.c.b16 %v1386, %v1385
      %v1530 = vpack.c.b16 %v1388, %v1387
      %v1531 = vpack.c.b16 %v1390, %v1389
      %v1532 = vpack.c.b16 %v1392, %v1391
      %v1533 = vpack.c.b16 %v1394, %v1393
      %v1534 = vpack.c.b16 %v1396, %v1395
      %v1535 = vpack.c.b16 %v1398, %v1397
      %v1536 = vpack.c.b16 %v1400, %v1399
      %v1537 = vpack.c.b16 %v1402, %v1401
      %v1538 = vpack.c.b16 %v1404, %v1403
      %v1539 = vpack.c.b16 %v1406, %v1405
      %v1540 = vpack.c.b16 %v1408, %v1407
      %v1541 = vpack.c.b16 %v1410, %v1409
      %v1542 = vpack.c.b16 %v1412, %v1411
      %v1543 = vpack.c.b16 %v1414, %v1413
      %v1544 = vpack.c.b16 %v1416, %v1415
      %v1545 = vpack.c.b16 %v1418, %v1417
      %v1546 = vpack.c.b16 %v1420, %v1419
      %v1547 = vpack.c.b16 %v1422, %v1421
      %v1548 = vpack.c.b16 %v1424, %v1423
      %v1549 = vpack.c.b16 %v1426, %v1425
      %v1550 = vpack.c.b16 %v1428, %v1427
      %v1551 = vpack.c.b16 %v1430, %v1429
      %v1552 = vpack.c.b16 %v1432, %v1431
      %v1553 = vpack.c.b16 %v1434, %v1433
      %v1554 = vpack.c.b16 %v1436, %v1435
      %v1555 = vpack.c.b16 %v1438, %v1437
      %v1556 = vpack.c.b16 %v1440, %v1439
      %v1557 = vpack.c.b16 %v1442, %v1441
      %v1558 = vpack.c.b16 %v1444, %v1443
      %v1559 = vpack.c.b16 %v1446, %v1445
      %v1560 = vpack.c.b16 %v1448, %v1447
      %v1561 = vpack.c.b16 %v1450, %v1449
      %v1562 = vpack.c.b16 %v1452, %v1451
      %v1563 = vpack.c.b16 %v1454, %v1453
      %v1564 = vpack.c.b16 %v1456, %v1455
      %v1565 = vpack.c.b16 %v1458, %v1457
      %v1566 = vpack.c.b16 %v1460, %v1459
      %v1567 = vpack.c.b16 %v1462, %v1461
      %v1568 = vpack.c.b16 %v1464, %v1463
      %v1569 = vpack.c.b16 %v1466, %v1465
      %v1570 = vpack.c.b16 %v1468, %v1467
      %v1571 = vpack.c.b16 %v1470, %v1469
      %v1572 = vpack.c.b16 %v1472, %v1471
      %v1573 = vpack.c.b16 %v1474, %v1473
      %v1574 = vpack.c.b16 %v1476, %v1475
      %v1575 = vpack.c.b16 %v1478, %v1477
      %v1576 = vpack.c.b16 %v1480, %v1479
      %v1577 = vpack.c.b16 %v1482, %v1481
      %v1578 = vpack.c.b16 %v1484, %v1483
      %v1579 = vpack.c.b16 %v1486, %v1485
      %v1580 = vpack.c.b16 %v1488, %v1487
      %v1581 = vpack.c.b16 %v1490, %v1489
      %v1582 = vpack.c.b16 %v1492, %v1491
      %v1583 = vpack.c.b16 %v1494, %v1493
      %v1584 = vpack.c.b16 %v1496, %v1495
      %v1585 = vpack.c.b16 %v1498, %v1497
      %v1586 = vpack.c.b16 %v1500, %v1499
      %v1587 = vpack.c.b16 %v1502, %v1501
      %v1588 = vpack.c.b16 %v1504, %v1503
      %v1589 = vpack.c.b16 %v1506, %v1505
      %v1590 = vpack.c.b16 %v1508, %v1507
      %v1591 = vpack.c.b16 %v1510, %v1509
      %v1592 = vpack.c.b16 %v1512, %v1511
      %v1593 = vpack.c.b16 %v1514, %v1513
      %v1594 = vpack.c.b16 %v1516, %v1515
      %v1595 = vpack.c.b16 %v1518, %v1517
      %v1596 = vpack.c.b16 %v1520, %v1519
      %v1597 = vpack.c.b16 %v1522, %v1521
      %v1598 = vpack.c.b16 %v1524, %v1523
      %v1599 = vpack.c.b16 %v1526, %v1525
      %v1600 = vpack.c.b16 %v1528, %v1527
      %1673 = vmatprep.subr.bf16.mxu0 0
      %1674 = vmatpush1.bf16.msra.mxu0 %v1529
      %1675 = vmatprep.subr.bf16.mxu0 0
      %1676 = vmatpush1.bf16.msra.mxu0 %v1530
      %1677 = vmatprep.subr.bf16.mxu0 0
      %1678 = vmatpush1.bf16.msra.mxu0 %v1531
      %1679 = vmatprep.subr.bf16.mxu0 0
      %1680 = vmatpush1.bf16.msra.mxu0 %v1532
      %1681 = vmatprep.subr.bf16.mxu0 0
      %1682 = vmatpush1.bf16.msra.mxu0 %v1533
      %1683 = vmatprep.subr.bf16.mxu0 0
      %1684 = vmatpush1.bf16.msra.mxu0 %v1534
      %1685 = vmatprep.subr.bf16.mxu0 0
      %1686 = vmatpush1.bf16.msra.mxu0 %v1535
      %1687 = vmatprep.subr.bf16.mxu0 0
      %1688 = vmatpush1.bf16.msra.mxu0 %v1536
      %1689 = vmatprep.subr.bf16.mxu0 0
      %1690 = vmatpush1.bf16.msra.mxu0 %v1537
      %1691 = vmatprep.subr.bf16.mxu0 0
      %1692 = vmatpush1.bf16.msra.mxu0 %v1538
      %1693 = vmatprep.subr.bf16.mxu0 0
      %1694 = vmatpush1.bf16.msra.mxu0 %v1539
      %1695 = vmatprep.subr.bf16.mxu0 0
      %1696 = vmatpush1.bf16.msra.mxu0 %v1540
      %1697 = vmatprep.subr.bf16.mxu0 0
      %1698 = vmatpush1.bf16.msra.mxu0 %v1541
      %1699 = vmatprep.subr.bf16.mxu0 0
      %1700 = vmatpush1.bf16.msra.mxu0 %v1542
      %1701 = vmatprep.subr.bf16.mxu0 0
      %1702 = vmatpush1.bf16.msra.mxu0 %v1543
      %1703 = vmatprep.subr.bf16.mxu0 0
      %1704 = vmatpush1.bf16.msra.mxu0 %v1544
      %1705 = vmatprep.mubr.bf16.mxu0 %v1025
      %1706 = vmatmul.mubr.bf16.gmra.mrb[0].mxu0 %v993
      %v1707 = vpop.f32.mrb[0].mxu0
      %v1708 = vadd.f32 0.0, %v1707
      %v1709 = vpop.f32.mrb[0].mxu0
      %v1710 = vpop.f32.mrb[0].mxu0
      %v1711 = vadd.f32 0.0, %v1710
      %v1712 = vpop.f32.mrb[0].mxu0
      %1713 = vmatprep.mubr.bf16.mxu0 %v1026
      %1714 = vmatmul.mubr.bf16.gmra.mrb[0].mxu0 %v994
      %v1715 = vpop.f32.mrb[0].mxu0
      %v1716 = vadd.f32 0.0, %v1715
      %v1717 = vpop.f32.mrb[0].mxu0
      %v1718 = vpop.f32.mrb[0].mxu0
      %v1719 = vadd.f32 0.0, %v1718
      %v1720 = vpop.f32.mrb[0].mxu0
      %1721 = vmatprep.mubr.bf16.mxu0 %v1027
      %1722 = vmatmul.mubr.bf16.gmra.mrb[0].mxu0 %v995
      %v1723 = vpop.f32.mrb[0].mxu0
      %v1724 = vadd.f32 0.0, %v1723
      %v1725 = vpop.f32.mrb[0].mxu0
      %v1726 = vpop.f32.mrb[0].mxu0
      %v1727 = vadd.f32 0.0, %v1726
      %v1728 = vpop.f32.mrb[0].mxu0
      %1729 = vmatprep.mubr.bf16.mxu0 %v1028
      %1730 = vmatmul.mubr.bf16.gmra.mrb[0].mxu0 %v996
      %v1731 = vpop.f32.mrb[0].mxu0
      %v1732 = vadd.f32 0.0, %v1731
      %v1733 = vpop.f32.mrb[0].mxu0
      %v1734 = vpop.f32.mrb[0].mxu0
      %v1735 = vadd.f32 0.0, %v1734
      %v1736 = vpop.f32.mrb[0].mxu0
      %1737 = vmatprep.mubr.bf16.mxu0 %v1029
      %1738 = vmatmul.mubr.bf16.gmra.mrb[0].mxu0 %v997
      %v1739 = vpop.f32.mrb[0].mxu0
      %v1740 = vadd.f32 0.0, %v1739
      %v1741 = vpop.f32.mrb[0].mxu0
      %v1742 = vpop.f32.mrb[0].mxu0
      %v1743 = vadd.f32 0.0, %v1742
      %v1744 = vpop.f32.mrb[0].mxu0
      %1745 = vmatprep.mubr.bf16.mxu0 %v1030
      %1746 = vmatmul.mubr.bf16.gmra.mrb[0].mxu0 %v998
      %v1747 = vpop.f32.mrb[0].mxu0
      %v1748 = vadd.f32 0.0, %v1747
      %v1749 = vpop.f32.mrb[0].mxu0
      %v1750 = vpop.f32.mrb[0].mxu0
      %v1751 = vadd.f32 0.0, %v1750
      %v1752 = vpop.f32.mrb[0].mxu0
      %1753 = vmatprep.mubr.bf16.mxu0 %v1031
      %1754 = vmatmul.mubr.bf16.gmra.mrb[0].mxu0 %v999
      %v1755 = vpop.f32.mrb[0].mxu0
      %v1756 = vadd.f32 0.0, %v1755
      %v1757 = vpop.f32.mrb[0].mxu0
      %v1758 = vpop.f32.mrb[0].mxu0
      %v1759 = vadd.f32 0.0, %v1758
      %v1760 = vpop.f32.mrb[0].mxu0
      %1761 = vmatprep.mubr.bf16.mxu0 %v1032
      %1762 = vmatmul.mubr.bf16.gmra.mrb[0].mxu0 %v1000
      %v1763 = vpop.f32.mrb[0].mxu0
      %v1764 = vadd.f32 0.0, %v1763
      %v1765 = vpop.f32.mrb[0].mxu0
      %v1766 = vpop.f32.mrb[0].mxu0
      %v1767 = vadd.f32 0.0, %v1766
      %v1768 = vpop.f32.mrb[0].mxu0
      %1769 = vdwg.mxu0
      %1770 = vmatprep.subr.bf16.mxu0 0
      %1771 = vmatpush1.bf16.msra.mxu0 %v1545
      %1772 = vmatprep.subr.bf16.mxu0 0
      %1773 = vmatpush1.bf16.msra.mxu0 %v1546
      %1774 = vmatprep.subr.bf16.mxu0 0
      %1775 = vmatpush1.bf16.msra.mxu0 %v1547
      %1776 = vmatprep.subr.bf16.mxu0 0
      %1777 = vmatpush1.bf16.msra.mxu0 %v1548
      %1778 = vmatprep.subr.bf16.mxu0 0
      %1779 = vmatpush1.bf16.msra.mxu0 %v1549
      %1780 = vmatprep.subr.bf16.mxu0 0
      %1781 = vmatpush1.bf16.msra.mxu0 %v1550
      %1782 = vmatprep.subr.bf16.mxu0 0
      %1783 = vmatpush1.bf16.msra.mxu0 %v1551
      %1784 = vmatprep.subr.bf16.mxu0 0
      %1785 = vmatpush1.bf16.msra.mxu0 %v1552
      %1786 = vmatprep.subr.bf16.mxu0 0
      %1787 = vmatpush1.bf16.msra.mxu0 %v1553
      %1788 = vmatprep.subr.bf16.mxu0 0
      %1789 = vmatpush1.bf16.msra.mxu0 %v1554
      %1790 = vmatprep.subr.bf16.mxu0 0
      %1791 = vmatpush1.bf16.msra.mxu0 %v1555
      %1792 = vmatprep.subr.bf16.mxu0 0
      %1793 = vmatpush1.bf16.msra.mxu0 %v1556
      %1794 = vmatprep.subr.bf16.mxu0 0
      %1795 = vmatpush1.bf16.msra.mxu0 %v1557
      %1796 = vmatprep.subr.bf16.mxu0 0
      %1797 = vmatpush1.bf16.msra.mxu0 %v1558
      %1798 = vmatprep.subr.bf16.mxu0 0
      %1799 = vmatpush1.bf16.msra.mxu0 %v1559
      %1800 = vmatprep.subr.bf16.mxu0 0
      %1801 = vmatpush1.bf16.msra.mxu0 %v1560
      %1802 = vmatprep.mubr.bf16.mxu0 %v994
      %1803 = vmatmul.mubr.bf16.gmra.mrb[0].mxu0 %v1057
      %v1804 = vpop.f32.mrb[0].mxu0
      %v1805 = vadd.f32 %v1708, %v1804
      %v1806 = vpop.f32.mrb[0].mxu0
      %v1807 = vpop.f32.mrb[0].mxu0
      %v1808 = vadd.f32 %v1711, %v1807
      %v1809 = vpop.f32.mrb[0].mxu0
      %1810 = vmatprep.mubr.bf16.mxu0 %v995
      %1811 = vmatmul.mubr.bf16.gmra.mrb[0].mxu0 %v1058
      %v1812 = vpop.f32.mrb[0].mxu0
      %v1813 = vadd.f32 %v1716, %v1812
      %v1814 = vpop.f32.mrb[0].mxu0
      %v1815 = vpop.f32.mrb[0].mxu0
      %v1816 = vadd.f32 %v1719, %v1815
      %v1817 = vpop.f32.mrb[0].mxu0
      %1818 = vmatprep.mubr.bf16.mxu0 %v996
      %1819 = vmatmul.mubr.bf16.gmra.mrb[0].mxu0 %v1059
      %v1820 = vpop.f32.mrb[0].mxu0
      %v1821 = vadd.f32 %v1724, %v1820
      %v1822 = vpop.f32.mrb[0].mxu0
      %v1823 = vpop.f32.mrb[0].mxu0
      %v1824 = vadd.f32 %v1727, %v1823
      %v1825 = vpop.f32.mrb[0].mxu0
      %1826 = vmatprep.mubr.bf16.mxu0 %v997
      %1827 = vmatmul.mubr.bf16.gmra.mrb[0].mxu0 %v1060
      %v1828 = vpop.f32.mrb[0].mxu0
      %v1829 = vadd.f32 %v1732, %v1828
      %v1830 = vpop.f32.mrb[0].mxu0
      %v1831 = vpop.f32.mrb[0].mxu0
      %v1832 = vadd.f32 %v1735, %v1831
      %v1833 = vpop.f32.mrb[0].mxu0
      %1834 = vmatprep.mubr.bf16.mxu0 %v998
      %1835 = vmatmul.mubr.bf16.gmra.mrb[0].mxu0 %v1061
      %v1836 = vpop.f32.mrb[0].mxu0
      %v1837 = vadd.f32 %v1740, %v1836
      %v1838 = vpop.f32.mrb[0].mxu0
      %v1839 = vpop.f32.mrb[0].mxu0
      %v1840 = vadd.f32 %v1743, %v1839
      %v1841 = vpop.f32.mrb[0].mxu0
      %1842 = vmatprep.mubr.bf16.mxu0 %v999
      %1843 = vmatmul.mubr.bf16.gmra.mrb[0].mxu0 %v1062
      %v1844 = vpop.f32.mrb[0].mxu0
      %v1845 = vadd.f32 %v1748, %v1844
      %v1846 = vpop.f32.mrb[0].mxu0
      %v1847 = vpop.f32.mrb[0].mxu0
      %v1848 = vadd.f32 %v1751, %v1847
      %v1849 = vpop.f32.mrb[0].mxu0
      %1850 = vmatprep.mubr.bf16.mxu0 %v1000
      %1851 = vmatmul.mubr.bf16.gmra.mrb[0].mxu0 %v1063
      %v1852 = vpop.f32.mrb[0].mxu0
      %v1853 = vadd.f32 %v1756, %v1852
      %v1854 = vpop.f32.mrb[0].mxu0
      %v1855 = vpop.f32.mrb[0].mxu0
      %v1856 = vadd.f32 %v1759, %v1855
      %v1857 = vpop.f32.mrb[0].mxu0
      %1858 = vmatprep.mubr.bf16.mxu0 %v1075
      %1859 = vmatmul.mubr.bf16.gmra.mrb[0].mxu0 %v1064
      %v1860 = vpop.f32.mrb[0].mxu0
      %v1861 = vadd.f32 %v1764, %v1860
      %v1862 = vpop.f32.mrb[0].mxu0
      %v1863 = vpop.f32.mrb[0].mxu0
      %v1864 = vadd.f32 %v1767, %v1863
      %v1865 = vpop.f32.mrb[0].mxu0
      %1866 = vdwg.mxu0
      %1867 = vmatprep.subr.bf16.mxu0 0
      %1868 = vmatpush1.bf16.msra.mxu0 %v1561
      %1869 = vmatprep.subr.bf16.mxu0 0
      %1870 = vmatpush1.bf16.msra.mxu0 %v1562
      %1871 = vmatprep.subr.bf16.mxu0 0
      %1872 = vmatpush1.bf16.msra.mxu0 %v1563
      %1873 = vmatprep.subr.bf16.mxu0 0
      %1874 = vmatpush1.bf16.msra.mxu0 %v1564
      %1875 = vmatprep.subr.bf16.mxu0 0
      %1876 = vmatpush1.bf16.msra.mxu0 %v1565
      %1877 = vmatprep.subr.bf16.mxu0 0
      %1878 = vmatpush1.bf16.msra.mxu0 %v1566
      %1879 = vmatprep.subr.bf16.mxu0 0
      %1880 = vmatpush1.bf16.msra.mxu0 %v1567
      %1881 = vmatprep.subr.bf16.mxu0 0
      %1882 = vmatpush1.bf16.msra.mxu0 %v1568
      %1883 = vmatprep.subr.bf16.mxu0 0
      %1884 = vmatpush1.bf16.msra.mxu0 %v1569
      %1885 = vmatprep.subr.bf16.mxu0 0
      %1886 = vmatpush1.bf16.msra.mxu0 %v1570
      %1887 = vmatprep.subr.bf16.mxu0 0
      %1888 = vmatpush1.bf16.msra.mxu0 %v1571
      %1889 = vmatprep.subr.bf16.mxu0 0
      %1890 = vmatpush1.bf16.msra.mxu0 %v1572
      %1891 = vmatprep.subr.bf16.mxu0 0
      %1892 = vmatpush1.bf16.msra.mxu0 %v1573
      %1893 = vmatprep.subr.bf16.mxu0 0
      %1894 = vmatpush1.bf16.msra.mxu0 %v1574
      %1895 = vmatprep.subr.bf16.mxu0 0
      %1896 = vmatpush1.bf16.msra.mxu0 %v1575
      %1897 = vmatprep.subr.bf16.mxu0 0
      %1898 = vmatpush1.bf16.msra.mxu0 %v1576
      %1899 = vmatprep.mubr.bf16.mxu0 %v1058
      %1900 = vmatmul.mubr.bf16.gmra.mrb[0].mxu0 %v1026
      %v1901 = vpop.f32.mrb[0].mxu0
      %v1902 = vadd.f32 %v1805, %v1901
      %v1903 = vpop.f32.mrb[0].mxu0
      %v1904 = vpop.f32.mrb[0].mxu0
      %v1905 = vadd.f32 %v1808, %v1904
      %v1906 = vpop.f32.mrb[0].mxu0
      %1907 = vmatprep.mubr.bf16.mxu0 %v1059
      %1908 = vmatmul.mubr.bf16.gmra.mrb[0].mxu0 %v1027
      %v1909 = vpop.f32.mrb[0].mxu0
      %v1910 = vadd.f32 %v1813, %v1909
      %v1911 = vpop.f32.mrb[0].mxu0
      %v1912 = vpop.f32.mrb[0].mxu0
      %v1913 = vadd.f32 %v1816, %v1912
      %v1914 = vpop.f32.mrb[0].mxu0
      %1915 = vmatprep.mubr.bf16.mxu0 %v1060
      %1916 = vmatmul.mubr.bf16.gmra.mrb[0].mxu0 %v1028
      %v1917 = vpop.f32.mrb[0].mxu0
      %v1918 = vadd.f32 %v1821, %v1917
      %v1919 = vpop.f32.mrb[0].mxu0
      %v1920 = vpop.f32.mrb[0].mxu0
      %v1921 = vadd.f32 %v1824, %v1920
      %v1922 = vpop.f32.mrb[0].mxu0
      %1923 = vmatprep.mubr.bf16.mxu0 %v1061
      %1924 = vmatmul.mubr.bf16.gmra.mrb[0].mxu0 %v1029
      %v1925 = vpop.f32.mrb[0].mxu0
      %v1926 = vadd.f32 %v1829, %v1925
      %v1927 = vpop.f32.mrb[0].mxu0
      %v1928 = vpop.f32.mrb[0].mxu0
      %v1929 = vadd.f32 %v1832, %v1928
      %v1930 = vpop.f32.mrb[0].mxu0
      %1931 = vmatprep.mubr.bf16.mxu0 %v1062
      %1932 = vmatmul.mubr.bf16.gmra.mrb[0].mxu0 %v1030
      %v1933 = vpop.f32.mrb[0].mxu0
      %v1934 = vadd.f32 %v1837, %v1933
      %v1935 = vpop.f32.mrb[0].mxu0
      %v1936 = vpop.f32.mrb[0].mxu0
      %v1937 = vadd.f32 %v1840, %v1936
      %v1938 = vpop.f32.mrb[0].mxu0
      %1939 = vmatprep.mubr.bf16.mxu0 %v1063
      %1940 = vmatmul.mubr.bf16.gmra.mrb[0].mxu0 %v1031
      %v1941 = vpop.f32.mrb[0].mxu0
      %v1942 = vadd.f32 %v1845, %v1941
      %v1943 = vpop.f32.mrb[0].mxu0
      %v1944 = vpop.f32.mrb[0].mxu0
      %v1945 = vadd.f32 %v1848, %v1944
      %v1946 = vpop.f32.mrb[0].mxu0
      %1947 = vmatprep.mubr.bf16.mxu0 %v1064
      %1948 = vmatmul.mubr.bf16.gmra.mrb[0].mxu0 %v1032
      %v1949 = vpop.f32.mrb[0].mxu0
      %v1950 = vadd.f32 %v1853, %v1949
      %v1951 = vpop.f32.mrb[0].mxu0
      %v1952 = vpop.f32.mrb[0].mxu0
      %v1953 = vadd.f32 %v1856, %v1952
      %v1954 = vpop.f32.mrb[0].mxu0
      %1955 = vmatprep.mubr.bf16.mxu0 %v1083
      %1956 = vmatmul.mubr.bf16.gmra.mrb[0].mxu0 %v1079
      %v1957 = vpop.f32.mrb[0].mxu0
      %v1958 = vadd.f32 %v1861, %v1957
      %v1959 = vpop.f32.mrb[0].mxu0
      %v1960 = vpop.f32.mrb[0].mxu0
      %v1961 = vadd.f32 %v1864, %v1960
      %v1962 = vpop.f32.mrb[0].mxu0
      %1963 = vdwg.mxu0
      %1964 = vmatprep.subr.bf16.mxu0 0
      %1965 = vmatpush1.bf16.msra.mxu0 %v1577
      %1966 = vmatprep.subr.bf16.mxu0 0
      %1967 = vmatpush1.bf16.msra.mxu0 %v1578
      %1968 = vmatprep.subr.bf16.mxu0 0
      %1969 = vmatpush1.bf16.msra.mxu0 %v1579
      %1970 = vmatprep.subr.bf16.mxu0 0
      %1971 = vmatpush1.bf16.msra.mxu0 %v1580
      %1972 = vmatprep.subr.bf16.mxu0 0
      %1973 = vmatpush1.bf16.msra.mxu0 %v1581
      %1974 = vmatprep.subr.bf16.mxu0 0
      %1975 = vmatpush1.bf16.msra.mxu0 %v1582
      %1976 = vmatprep.subr.bf16.mxu0 0
      %1977 = vmatpush1.bf16.msra.mxu0 %v1583
      %1978 = vmatprep.subr.bf16.mxu0 0
      %1979 = vmatpush1.bf16.msra.mxu0 %v1584
      %1980 = vmatprep.subr.bf16.mxu0 0
      %1981 = vmatpush1.bf16.msra.mxu0 %v1585
      %1982 = vmatprep.subr.bf16.mxu0 0
      %1983 = vmatpush1.bf16.msra.mxu0 %v1586
      %1984 = vmatprep.subr.bf16.mxu0 0
      %1985 = vmatpush1.bf16.msra.mxu0 %v1587
      %1986 = vmatprep.subr.bf16.mxu0 0
      %1987 = vmatpush1.bf16.msra.mxu0 %v1588
      %1988 = vmatprep.subr.bf16.mxu0 0
      %1989 = vmatpush1.bf16.msra.mxu0 %v1589
      %1990 = vmatprep.subr.bf16.mxu0 0
      %1991 = vmatpush1.bf16.msra.mxu0 %v1590
      %1992 = vmatprep.subr.bf16.mxu0 0
      %1993 = vmatpush1.bf16.msra.mxu0 %v1591
      %1994 = vmatprep.subr.bf16.mxu0 0
      %1995 = vmatpush1.bf16.msra.mxu0 %v1592
      %1996 = vmatprep.mubr.bf16.mxu0 %v1027
      %1997 = vmatmul.mubr.bf16.gmra.mrb[0].mxu0 %v995
      %v1998 = vpop.f32.mrb[0].mxu0
      %v1999 = vadd.f32 %v1902, %v1998
      %v2000 = vpop.f32.mrb[0].mxu0
      %v2001 = vpop.f32.mrb[0].mxu0
      %v2002 = vadd.f32 %v1905, %v2001
      %v2003 = vpop.f32.mrb[0].mxu0
      %2004 = vmatprep.mubr.bf16.mxu0 %v1028
      %2005 = vmatmul.mubr.bf16.gmra.mrb[0].mxu0 %v996
      %v2006 = vpop.f32.mrb[0].mxu0
      %v2007 = vadd.f32 %v1910, %v2006
      %v2008 = vpop.f32.mrb[0].mxu0
      %v2009 = vpop.f32.mrb[0].mxu0
      %v2010 = vadd.f32 %v1913, %v2009
      %v2011 = vpop.f32.mrb[0].mxu0
      %2012 = vmatprep.mubr.bf16.mxu0 %v1029
      %2013 = vmatmul.mubr.bf16.gmra.mrb[0].mxu0 %v997
      %v2014 = vpop.f32.mrb[0].mxu0
      %v2015 = vadd.f32 %v1918, %v2014
      %v2016 = vpop.f32.mrb[0].mxu0
      %v2017 = vpop.f32.mrb[0].mxu0
      %v2018 = vadd.f32 %v1921, %v2017
      %v2019 = vpop.f32.mrb[0].mxu0
      %2020 = vmatprep.mubr.bf16.mxu0 %v1030
      %2021 = vmatmul.mubr.bf16.gmra.mrb[0].mxu0 %v998
      %v2022 = vpop.f32.mrb[0].mxu0
      %v2023 = vadd.f32 %v1926, %v2022
      %v2024 = vpop.f32.mrb[0].mxu0
      %v2025 = vpop.f32.mrb[0].mxu0
      %v2026 = vadd.f32 %v1929, %v2025
      %v2027 = vpop.f32.mrb[0].mxu0
      %2028 = vmatprep.mubr.bf16.mxu0 %v1031
      %2029 = vmatmul.mubr.bf16.gmra.mrb[0].mxu0 %v999
      %v2030 = vpop.f32.mrb[0].mxu0
      %v2031 = vadd.f32 %v1934, %v2030
      %v2032 = vpop.f32.mrb[0].mxu0
      %v2033 = vpop.f32.mrb[0].mxu0
      %v2034 = vadd.f32 %v1937, %v2033
      %v2035 = vpop.f32.mrb[0].mxu0
      %2036 = vmatprep.mubr.bf16.mxu0 %v1032
      %2037 = vmatmul.mubr.bf16.gmra.mrb[0].mxu0 %v1000
      %v2038 = vpop.f32.mrb[0].mxu0
      %v2039 = vadd.f32 %v1942, %v2038
      %v2040 = vpop.f32.mrb[0].mxu0
      %v2041 = vpop.f32.mrb[0].mxu0
      %v2042 = vadd.f32 %v1945, %v2041
      %v2043 = vpop.f32.mrb[0].mxu0
      %2044 = vmatprep.mubr.bf16.mxu0 %v1079
      %2045 = vmatmul.mubr.bf16.gmra.mrb[0].mxu0 %v1075
      %v2046 = vpop.f32.mrb[0].mxu0
      %v2047 = vadd.f32 %v1950, %v2046
      %v2048 = vpop.f32.mrb[0].mxu0
      %v2049 = vpop.f32.mrb[0].mxu0
      %v2050 = vadd.f32 %v1953, %v2049
      %v2051 = vpop.f32.mrb[0].mxu0
      %2052 = vmatprep.mubr.bf16.mxu0 %v1091
      %2053 = vmatmul.mubr.bf16.gmra.mrb[0].mxu0 %v1087
      %v2054 = vpop.f32.mrb[0].mxu0
      %v2055 = vadd.f32 %v1958, %v2054
      %v2056 = vpop.f32.mrb[0].mxu0
      %v2057 = vpop.f32.mrb[0].mxu0
      %v2058 = vadd.f32 %v1961, %v2057
      %v2059 = vpop.f32.mrb[0].mxu0
      %2060 = vdwg.mxu0
      %2061 = vmatprep.subr.bf16.mxu0 0
      %2062 = vmatpush1.bf16.msra.mxu0 %v1593
      %2063 = vmatprep.subr.bf16.mxu0 0
      %2064 = vmatpush1.bf16.msra.mxu0 %v1594
      %2065 = vmatprep.subr.bf16.mxu0 0
      %2066 = vmatpush1.bf16.msra.mxu0 %v1595
      %2067 = vmatprep.subr.bf16.mxu0 0
      %2068 = vmatpush1.bf16.msra.mxu0 %v1596
      %2069 = vmatprep.subr.bf16.mxu0 0
      %2070 = vmatpush1.bf16.msra.mxu0 %v1597
      %2071 = vmatprep.subr.bf16.mxu0 0
      %2072 = vmatpush1.bf16.msra.mxu0 %v1598
      %2073 = vmatprep.subr.bf16.mxu0 0
      %2074 = vmatpush1.bf16.msra.mxu0 %v1599
      %2075 = vmatprep.subr.bf16.mxu0 0
      %2076 = vmatpush1.bf16.msra.mxu0 %v1600
      %2077 = vmatprep.subr.bf16.mxu0 0
      %2078 = vmatpush1.bf16.msra.mxu0 0
      %2079 = vmatprep.subr.bf16.mxu0 0
      %2080 = vmatpush1.bf16.msra.mxu0 0
      %2081 = vmatprep.subr.bf16.mxu0 0
      %2082 = vmatpush1.bf16.msra.mxu0 0
      %2083 = vmatprep.subr.bf16.mxu0 0
      %2084 = vmatpush1.bf16.msra.mxu0 0
      %2085 = vmatprep.subr.bf16.mxu0 0
      %2086 = vmatpush1.bf16.msra.mxu0 0
      %2087 = vmatprep.subr.bf16.mxu0 0
      %2088 = vmatpush1.bf16.msra.mxu0 0
      %2089 = vmatprep.subr.bf16.mxu0 0
      %2090 = vmatpush1.bf16.msra.mxu0 0
      %2091 = vmatprep.subr.bf16.mxu0 0
      %2092 = vmatpush1.bf16.msra.mxu0 0
      %2093 = vmatprep.mubr.bf16.mxu0 0
      %2094 = vmatmul.mubr.bf16.gmra.mrb[0].mxu0 %v1059
      %v2095 = vpop.f32.mrb[0].mxu0
      %v2096 = vadd.f32 %v1999, %v2095
      %v2097 = vpop.f32.mrb[0].mxu0
      %v2098 = vpop.f32.mrb[0].mxu0
      %v2099 = vadd.f32 %v2002, %v2098
      %v2100 = vpop.f32.mrb[0].mxu0
      %2101 = vmatprep.mubr.bf16.mxu0 0
      %2102 = vmatmul.mubr.bf16.gmra.mrb[0].mxu0 %v1060
      %v2103 = vpop.f32.mrb[0].mxu0
      %v2104 = vadd.f32 %v2007, %v2103
      %v2105 = vpop.f32.mrb[0].mxu0
      %v2106 = vpop.f32.mrb[0].mxu0
      %v2107 = vadd.f32 %v2010, %v2106
      %v2108 = vpop.f32.mrb[0].mxu0
      %2109 = vmatprep.mubr.bf16.mxu0 0
      %2110 = vmatmul.mubr.bf16.gmra.mrb[0].mxu0 %v1061
      %v2111 = vpop.f32.mrb[0].mxu0
      %v2112 = vadd.f32 %v2015, %v2111
      %v2113 = vpop.f32.mrb[0].mxu0
      %v2114 = vpop.f32.mrb[0].mxu0
      %v2115 = vadd.f32 %v2018, %v2114
      %v2116 = vpop.f32.mrb[0].mxu0
      %2117 = vmatprep.mubr.bf16.mxu0 0
      %2118 = vmatmul.mubr.bf16.gmra.mrb[0].mxu0 %v1062
      %v2119 = vpop.f32.mrb[0].mxu0
      %v2120 = vadd.f32 %v2023, %v2119
      %v2121 = vpop.f32.mrb[0].mxu0
      %v2122 = vpop.f32.mrb[0].mxu0
      %v2123 = vadd.f32 %v2026, %v2122
      %v2124 = vpop.f32.mrb[0].mxu0
      %2125 = vmatprep.mubr.bf16.mxu0 0
      %2126 = vmatmul.mubr.bf16.gmra.mrb[0].mxu0 %v1063
      %v2127 = vpop.f32.mrb[0].mxu0
      %v2128 = vadd.f32 %v2031, %v2127
      %v2129 = vpop.f32.mrb[0].mxu0
      %v2130 = vpop.f32.mrb[0].mxu0
      %v2131 = vadd.f32 %v2034, %v2130
      %v2132 = vpop.f32.mrb[0].mxu0
      %2133 = vmatprep.mubr.bf16.mxu0 0
      %2134 = vmatmul.mubr.bf16.gmra.mrb[0].mxu0 %v1064
      %v2135 = vpop.f32.mrb[0].mxu0
      %v2136 = vadd.f32 %v2039, %v2135
      %v2137 = vpop.f32.mrb[0].mxu0
      %v2138 = vpop.f32.mrb[0].mxu0
      %v2139 = vadd.f32 %v2042, %v2138
      %v2140 = vpop.f32.mrb[0].mxu0
      %2141 = vmatprep.mubr.bf16.mxu0 0
      %2142 = vmatmul.mubr.bf16.gmra.mrb[0].mxu0 %v1083
      %v2143 = vpop.f32.mrb[0].mxu0
      %v2144 = vadd.f32 %v2047, %v2143
      %v2145 = vpop.f32.mrb[0].mxu0
      %v2146 = vpop.f32.mrb[0].mxu0
      %v2147 = vadd.f32 %v2050, %v2146
      %v2148 = vpop.f32.mrb[0].mxu0
      %2149 = vmatprep.mubr.bf16.mxu0 0
      %2150 = vmatmul.mubr.bf16.gmra.mrb[0].mxu0 %v1095
      %v2151 = vpop.f32.mrb[0].mxu0
      %v2152 = vadd.f32 %v2055, %v2151
      %v2153 = vpop.f32.mrb[0].mxu0
      %v2154 = vpop.f32.mrb[0].mxu0
      %v2155 = vadd.f32 %v2058, %v2154
      %v2156 = vpop.f32.mrb[0].mxu0
      %2157 = vdwg.mxu0
      %v2158 = vpack.c.bf16 %v2099, %v2096
      %v2159 = vpack.c.bf16 %v2107, %v2104
      %v2160 = vpack.c.bf16 %v2115, %v2112
      %v2161 = vpack.c.bf16 %v2123, %v2120
      %v2162 = vpack.c.bf16 %v2131, %v2128
      %v2163 = vpack.c.bf16 %v2139, %v2136
      %v2164 = vpack.c.bf16 %v2147, %v2144
      %v2165 = vpack.c.bf16 %v2155, %v2152
      %v2174 = vunpack.c.l.b16 %v2158
      %v2175 = vunpack.c.h.b16 %v2158
      %v2176 = vunpack.c.l.b16 %v2159
      %v2177 = vunpack.c.h.b16 %v2159
      %v2178 = vunpack.c.l.b16 %v2160
      %v2179 = vunpack.c.h.b16 %v2160
      %v2180 = vunpack.c.l.b16 %v2161
      %v2181 = vunpack.c.h.b16 %v2161
      %v2182 = vunpack.c.l.b16 %v2162
      %v2183 = vunpack.c.h.b16 %v2162
      %v2184 = vunpack.c.l.b16 %v2163
      %v2185 = vunpack.c.h.b16 %v2163
      %v2186 = vunpack.c.l.b16 %v2164
      %v2187 = vunpack.c.h.b16 %v2164
      %v2188 = vunpack.c.l.b16 %v2165
      %v2189 = vunpack.c.h.b16 %v2165
      %v2190 = vpack.c.b16 %v2174, %v2174
      %v2191 = vpack.c.b16 %v2175, %v2175
      %v2192 = vpack.c.b16 %v2176, %v2176
      %v2193 = vpack.c.b16 %v2177, %v2177
      %v2194 = vpack.c.b16 %v2178, %v2178
      %v2195 = vpack.c.b16 %v2179, %v2179
      %v2196 = vpack.c.b16 %v2180, %v2180
      %v2197 = vpack.c.b16 %v2181, %v2181
      %v2198 = vpack.c.b16 %v2182, %v2182
      %v2199 = vpack.c.b16 %v2183, %v2183
      %v2200 = vpack.c.b16 %v2184, %v2184
      %v2201 = vpack.c.b16 %v2185, %v2185
      %v2202 = vpack.c.b16 %v2186, %v2186
      %v2203 = vpack.c.b16 %v2187, %v2187
      %v2204 = vpack.c.b16 %v2188, %v2188
      %v2205 = vpack.c.b16 %v2189, %v2189
      %2222 = vst [vmem:[%s296] sm:$0xf] %v2190
      %2223 = vst [vmem:[%s296 + $0x4] sm:$0xf] %v2191
      %2224 = vst [vmem:[%s296 + $0x8] sm:$0xf] %v2192
      %2225 = vst [vmem:[%s296 + $0xc] sm:$0xf] %v2193
      %2226 = vst [vmem:[%s296 + $0x10] sm:$0xf] %v2194
      %2227 = vst [vmem:[%s296 + $0x14] sm:$0xf] %v2195
      %2228 = vst [vmem:[%s296 + $0x18] sm:$0xf] %v2196
      %2229 = vst [vmem:[%s296 + $0x1c] sm:$0xf] %v2197
      %2230 = vst [vmem:[%s296 + $0x20] sm:$0xf] %v2198
      %2231 = vst [vmem:[%s296 + $0x24] sm:$0xf] %v2199
      %2232 = vst [vmem:[%s296 + $0x28] sm:$0xf] %v2200
      %2233 = vst [vmem:[%s296 + $0x2c] sm:$0xf] %v2201
      %2234 = vst [vmem:[%s296 + $0x30] sm:$0xf] %v2202
      %2235 = vst [vmem:[%s296 + $0x34] sm:$0xf] %v2203
      %2236 = vst [vmem:[%s296 + $0x38] sm:$0xf] %v2204
      %2237 = vst [vmem:[%s296 + $0x3c] sm:$0xf] %v2205
      %v2238 = vadd.f32 %v2096, %v2099
      %v2239 = vadd.f32 %v2238, %v2104
      %v2240 = vadd.f32 %v2239, %v2107
      %v2241 = vadd.f32 %v2240, %v2112
      %v2242 = vadd.f32 %v2241, %v2115
      %v2243 = vadd.f32 %v2242, %v2120
      %v2244 = vadd.f32 %v2243, %v2123
      %v2245 = vadd.f32 %v2244, %v2128
      %v2246 = vadd.f32 %v2245, %v2131
      %v2247 = vadd.f32 %v2246, %v2136
      %v2248 = vadd.f32 %v2247, %v2139
      %v2249 = vadd.f32 %v2248, %v2144
      %v2250 = vadd.f32 %v2249, %v2147
      %v2251 = vadd.f32 %v2250, %v2152
      %v2252 = vadd.f32 %v2251, %v2155
      %v2253 = vrot.slane %v2252, 4
      %v2254 = vadd.f32 %v2252, %v2253
      %v2255 = vrot.slane %v2254, 2
      %v2256 = vadd.f32 %v2254, %v2255
      %v2257 = vrot.slane %v2256, 1
      %v2258 = vadd.f32 %v2256, %v2257
      %2259 = vst [vmem:[%s304] sm:$0x1] %v2258
      %v2260 = vmul.f32 %v2096, %v2096
      %v2261 = vmul.f32 %v2099, %v2099
      %v2262 = vmul.f32 %v2104, %v2104
      %v2263 = vmul.f32 %v2107, %v2107
      %v2264 = vmul.f32 %v2112, %v2112
      %v2265 = vmul.f32 %v2115, %v2115
      %v2266 = vmul.f32 %v2120, %v2120
      %v2267 = vmul.f32 %v2123, %v2123
      %v2268 = vmul.f32 %v2128, %v2128
      %v2269 = vmul.f32 %v2131, %v2131
      %v2270 = vmul.f32 %v2136, %v2136
      %v2271 = vmul.f32 %v2139, %v2139
      %v2272 = vmul.f32 %v2144, %v2144
      %v2273 = vmul.f32 %v2147, %v2147
      %v2274 = vmul.f32 %v2152, %v2152
      %v2275 = vmul.f32 %v2155, %v2155
      %v2276 = vadd.f32 %v2260, %v2261
      %v2277 = vadd.f32 %v2276, %v2262
      %v2278 = vadd.f32 %v2277, %v2263
      %v2279 = vadd.f32 %v2278, %v2264
      %v2280 = vadd.f32 %v2279, %v2265
      %v2281 = vadd.f32 %v2280, %v2266
      %v2282 = vadd.f32 %v2281, %v2267
      %v2283 = vadd.f32 %v2282, %v2268
      %v2284 = vadd.f32 %v2283, %v2269
      %v2285 = vadd.f32 %v2284, %v2270
      %v2286 = vadd.f32 %v2285, %v2271
      %v2287 = vadd.f32 %v2286, %v2272
      %v2288 = vadd.f32 %v2287, %v2273
      %v2289 = vadd.f32 %v2288, %v2274
      %v2290 = vadd.f32 %v2289, %v2275
      %v2291 = vrot.slane %v2290, 4
      %v2292 = vadd.f32 %v2290, %v2291
      %v2293 = vrot.slane %v2292, 2
      %v2294 = vadd.f32 %v2292, %v2293
      %v2295 = vrot.slane %v2294, 1
      %v2296 = vadd.f32 %v2294, %v2295
      %2297 = vst [vmem:[%s311] sm:$0x1] %v2296
      %s2298 = smul.u32 16, %s23
      %p2299 = scmp.lt.s32.totalorder %s22, 1
      %s2300 = scalar_select %p2299, %s22, 1
      %p2301 = scmp.lt.s32.totalorder %s2298, 31
      %s2302 = scalar_select %p2301, %s2298, 31
      %s2303 = smul.addr %s2300, 32
      %s2304 = sadd.s32 %s2302, %s2303
      %s2305 = smul.addr %s2304, 4
      %s2306 = scalar_lea.vmem %s4, %s2305
      %p2307 = scmp.lt.s32.totalorder %s22, 1
      %s2308 = scalar_select %p2307, %s22, 1
      %p2309 = scmp.lt.s32.totalorder %s23, 1
      %s2310 = scalar_select %p2309, %s23, 1
      %s2311 = smul.addr %s2308, 2
      %s2312 = sadd.s32 %s2310, %s2311
      %s2313 = scalar_lea.vmem %s5, %s2312
      %p2314 = scmp.lt.s32.totalorder %s22, 1
      %s2315 = scalar_select %p2314, %s22, 1
      %p2316 = scmp.lt.s32.totalorder %s23, 1
      %s2317 = scalar_select %p2316, %s23, 1
      %s2318 = smul.addr %s2315, 2
      %s2319 = sadd.s32 %s2317, %s2318
      %s2320 = scalar_lea.vmem %s6, %s2319
      // Predicated region
      $region37: #{sharp_sep_conv.3} parent=35 // pred_check
        %p2321 = pneg %p139
      $region38: #{sharp_sep_conv.3} parent=35 // pred_check_branch
        %2323 = sbr.rel (%p2321) target = $region40
      $region39: #{sharp_sep_conv.3} parent=35 // pred_region
        %s2324 = smul.u32 16, %s23
      $region40: #{sharp_sep_conv.3} parent=35 // pred_fallthru
        _
      // Predicated region
      $region41: #{sharp_sep_conv.3} parent=35 // pred_check
        %p2325 = pneg %p167
      $region42: #{sharp_sep_conv.3} parent=35 // pred_check_branch
        %2327 = sbr.rel (%p2325) target = $region44
      $region43: #{sharp_sep_conv.3} parent=35 // pred_region
        _
      $region44: #{sharp_sep_conv.3} parent=35 // pred_fallthru
        _
      // Predicated region
      $region45: #{sharp_sep_conv.3} parent=35 // pred_check
        %p2328 = pneg %p195
      $region46: #{sharp_sep_conv.3} parent=35 // pred_check_branch
        %2330 = sbr.rel (%p2328) target = $region48
      $region47: #{sharp_sep_conv.3} parent=35 // pred_region
        _
      $region48: #{sharp_sep_conv.3} parent=35 // pred_fallthru
        _
    $region36: #{sharp_sep_conv.3} parent=5 // pred_fallthru
      _
    %p2331 = scmp.le.s32.totalorder 2, %s13
    // Predicated region
    $region49: #{sharp_sep_conv.3} parent=5 // pred_check
      %p2332 = pneg %p2331
    $region50: #{sharp_sep_conv.3} parent=5 // pred_check_branch
      %2334 = sbr.rel (%p2332) target = $region52
    $region51: #{sharp_sep_conv.3} parent=5 // pred_region
      %s2335 = ssub.s32 %s13, 2
      // Predicated region
      $region53: #{sharp_sep_conv.3} parent=51 // pred_check
        %p2336 = pneg %p145
      $region54: #{sharp_sep_conv.3} parent=51 // pred_check_branch
        %2338 = sbr.rel (%p2336) target = $region56
      $region55: #{sharp_sep_conv.3} parent=51 // pred_region
        %s2339 = smul.u32 16, %s25
        %p2340 = scmp.lt.s32.totalorder %s24, 1
        %s2341 = scalar_select %p2340, %s24, 1
        %p2342 = scmp.lt.s32.totalorder %s2339, 31
        %s2343 = scalar_select %p2342, %s2339, 31
        %s2344 = smul.addr %s2341, 32
        %s2345 = sadd.s32 %s2343, %s2344
        %s2346 = smul.addr %s2345, 4
        %s2347 = scalar_lea.vmem %s4, %s2346
      $region56: #{sharp_sep_conv.3} parent=51 // pred_fallthru
        _
      // Predicated region
      $region57: #{sharp_sep_conv.3} parent=51 // pred_check
        %p2348 = pneg %p173
      $region58: #{sharp_sep_conv.3} parent=51 // pred_check_branch
        %2350 = sbr.rel (%p2348) target = $region60
      $region59: #{sharp_sep_conv.3} parent=51 // pred_region
        %p2351 = scmp.lt.s32.totalorder %s24, 1
        %s2352 = scalar_select %p2351, %s24, 1
        %p2353 = scmp.lt.s32.totalorder %s25, 1
        %s2354 = scalar_select %p2353, %s25, 1
        %s2355 = smul.addr %s2352, 2
        %s2356 = sadd.s32 %s2354, %s2355
        %s2357 = scalar_lea.vmem %s5, %s2356
      $region60: #{sharp_sep_conv.3} parent=51 // pred_fallthru
        _
      // Predicated region
      $region61: #{sharp_sep_conv.3} parent=51 // pred_check
        %p2358 = pneg %p201
      $region62: #{sharp_sep_conv.3} parent=51 // pred_check_branch
        %2360 = sbr.rel (%p2358) target = $region64
      $region63: #{sharp_sep_conv.3} parent=51 // pred_region
        %p2361 = scmp.lt.s32.totalorder %s24, 1
        %s2362 = scalar_select %p2361, %s24, 1
        %p2363 = scmp.lt.s32.totalorder %s25, 1
        %s2364 = scalar_select %p2363, %s25, 1
        %s2365 = smul.addr %s2362, 2
        %s2366 = sadd.s32 %s2364, %s2365
        %s2367 = scalar_lea.vmem %s6, %s2366
      $region64: #{sharp_sep_conv.3} parent=51 // pred_fallthru
        _
    $region52: #{sharp_sep_conv.3} parent=5 // pred_fallthru
      _
  $region6: #{sharp_sep_conv.3} parent=0 // loop_footer
    %s17 = sadd.s32 1, %s13
  $region7: #{sharp_sep_conv.3} parent=0 // loop_footer_branch
    %12 = sbr.rel target = $region3
  $region8: #{sharp_sep_conv.3} parent=0 // loop_exit
    _

</llo_original>
